<compile_context>
chip_gen: v5e
topology: v5e:2x2
jax: 0.10.0
libtpu: 0.0.40
codegen_flags: <defaults>
</compile_context>

<pallas_src>
import functools

import jax
import jax.numpy as jnp
from jax.experimental import pallas as pl
from jax.experimental.pallas import tpu as pltpu


def _round_up(x, m):
    return ((x + m - 1) // m) * m


def _cdiv(a, b):
    return -(-a // b)


@functools.lru_cache(maxsize=None)
def _tpu_budget():
    """(vmem_limit_bytes, tm_max), gated per TPU generation.

    v7x has 64 MiB VMEM per TensorCore -> stay at a 32 MiB scoped limit and
    tm <= 512; 128 MiB parts (v5e/v6e) can afford 64 MiB and tm up to 1024.
    """
    try:
        cap = int(pltpu.get_tpu_info().vmem_capacity_bytes)
    except Exception:
        cap = 64 * 1024 * 1024  # unknown -> assume the small-VMEM generation
    if cap >= 100 * 1024 * 1024:
        return 64 * 1024 * 1024, 1024
    return 32 * 1024 * 1024, 512


# ----------------------------------------------------------------------------
# Fused matmul kernel: out = act( x @ w_scaled + bias [+ residual] )
# (BN scale pre-folded into w; f32 epilogue, bf16 store.)
# ----------------------------------------------------------------------------
def _mm_bias_kernel(*refs, has_res, relu):
    if has_res:
        x_ref, w_ref, b_ref, r_ref, o_ref = refs
    else:
        x_ref, w_ref, b_ref, o_ref = refs
    acc = jnp.dot(x_ref[...], w_ref[...], preferred_element_type=jnp.float32)
    acc = acc + b_ref[...]
    if has_res:
        acc = acc + r_ref[...].astype(jnp.float32)
    if relu:
        acc = jnp.maximum(acc, 0.0)
    o_ref[...] = acc.astype(o_ref.dtype)


def _pick_mm_tiles(M, N, tm_max, *, tn_max=512, min_steps=8):
    """Row / output-channel tiles giving >= min_steps grid steps."""
    # Output-channel stripe: full width when small, else a lane-dense stripe
    # so the weight / bias / output tiles stay bounded on wide layers.
    if N <= tn_max:
        tn = N
    elif N % tn_max == 0:
        tn = tn_max
    elif N % 256 == 0:
        tn = 256
    elif N % 128 == 0:
        tn = 128
    else:
        tn = N
    nj = _cdiv(N, tn)

    # Row tile: as large as possible while still giving the pipeline and both
    # v7x TensorCores enough grid steps.
    tm = min(tm_max, M)
    if tm != M:
        tm = max(8, (tm // 8) * 8)
    while tm > 8 and nj * _cdiv(M, tm) < min_steps:
        nt = max(8, ((tm // 2) // 8) * 8)
        if nt == tm:
            break
        tm = nt
    return tm, tn


def fused_matmul_bias(x2d, w2d, bias, *, relu, residual=None,
                      out_dtype=jnp.bfloat16):
    """x2d: (M, K) bf16, w2d: (K, N) bf16 (BN scale folded), bias: (N,) f32."""
    M, K = x2d.shape
    K2, N = w2d.shape
    assert K == K2
    vmem_limit, tm_max = _tpu_budget()
    tm, tn = _pick_mm_tiles(M, N, tm_max)
    # Weight-stripe axis (j) outermost so the (K, tn) weight + bias stay
    # resident across the inner row-tile axis (i).
    grid = (_cdiv(N, tn), _cdiv(M, tm))
    bias = bias.reshape(1, N).astype(jnp.float32)
    has_res = residual is not None

    in_specs = [
        pl.BlockSpec((tm, K), lambda j, i: (i, 0)),   # activation row tile
        pl.BlockSpec((K, tn), lambda j, i: (0, j)),   # resident weight stripe
        pl.BlockSpec((1, tn), lambda j, i: (0, j)),   # folded-BN bias stripe
    ]
    args = [x2d, w2d, bias]
    if has_res:
        in_specs.append(pl.BlockSpec((tm, tn), lambda j, i: (i, j)))
        args.append(residual)

    bytes_accessed = (int(M * K) * x2d.dtype.itemsize * _cdiv(N, tn)
                      + int(K * N) * w2d.dtype.itemsize
                      + int(M * N) * jnp.dtype(out_dtype).itemsize)
    if has_res:
        bytes_accessed += int(M * N) * residual.dtype.itemsize

    kernel = functools.partial(_mm_bias_kernel, has_res=has_res, relu=relu)
    return pl.pallas_call(
        kernel,
        out_shape=jax.ShapeDtypeStruct((M, N), out_dtype),
        grid=grid,
        in_specs=in_specs,
        out_specs=pl.BlockSpec((tm, tn), lambda j, i: (i, j)),
        compiler_params=pltpu.CompilerParams(
            dimension_semantics=("parallel", "parallel"),
            vmem_limit_bytes=vmem_limit),
        cost_estimate=pl.CostEstimate(
            flops=2 * M * K * N, transcendentals=0,
            bytes_accessed=bytes_accessed),
    )(*args)


# ----------------------------------------------------------------------------
# Fused 3x3 conv + bn + relu: grid = (batch, output-row tile); each step
# accumulates 9 shifted tap matmuls for TR output rows in f32 on-chip.
# ----------------------------------------------------------------------------
def _conv3x3_kernel(x_ref, w_ref, b_ref, o_ref, *, taps, TR, Wout, Wslice):
    t = pl.program_id(1)
    row0 = t * TR
    if TR > 1:
        row0 = pl.multiple_of(row0, TR)
    Cin = x_ref.shape[-1]
    Cout = o_ref.shape[-1]
    # Straight chained dot accumulation: no epilogue ops interleaved between
    # the MXU pushes (lets v7x accumulate in the MRB).
    acc = jnp.zeros((TR * Wslice, Cout), jnp.float32)
    for k, (p, oh, ow) in enumerate(taps):
        xs = x_ref[0, p, pl.ds(row0 + oh, TR), ow:ow + Wslice, :]
        xs = xs.reshape(TR * Wslice, Cin)   # Wslice % 16 == 0 -> layout-preserving
        acc = acc + jnp.dot(xs, w_ref[k], preferred_element_type=jnp.float32)
    acc = acc + b_ref[...]
    acc = jnp.maximum(acc, 0.0)
    o_ref[0] = acc.reshape(TR, Wslice, Cout)[:, :Wout, :].astype(o_ref.dtype)


def _pick_row_tile(N, Hout, *, tr_max=8, min_steps=8):
    tr = max(1, min(tr_max, Hout))
    while tr > 1 and N * _cdiv(Hout, tr) < min_steps:
        tr = max(1, tr // 2)
    return tr


def conv3x3_bn_relu(x, w_oihw, scale, bias, *, stride, groups):
    """x: (N, H, W, Cin) bf16; w_oihw: (Cout, Cin//groups, 3, 3) f32."""
    N, H, W, Cin = x.shape
    Cout = w_oihw.shape[0]
    Hout = (H + 2 - 3) // stride + 1
    Wout = (W + 2 - 3) // stride + 1
    Wslice = _round_up(Wout, 16)          # bf16 sublane alignment
    TR = _pick_row_tile(N, Hout)
    n_row_tiles = _cdiv(Hout, TR)

    # Fold BN scale into weights; expand groups to a block-diagonal dense weight.
    cin_g = Cin // groups
    cout_g = Cout // groups
    if groups == 1:
        w = jnp.transpose(w_oihw, (2, 3, 1, 0))                 # (3,3,Cin,Cout)
    else:
        w = jnp.zeros((3, 3, Cin, Cout), jnp.float32)
        for g in range(groups):
            wg = jnp.transpose(w_oihw[g * cout_g:(g + 1) * cout_g], (2, 3, 1, 0))
            w = w.at[:, :, g * cin_g:(g + 1) * cin_g,
                     g * cout_g:(g + 1) * cout_g].set(wg)
    w = (w * scale[None, None, None, :]).reshape(9, Cin, Cout).astype(jnp.bfloat16)
    bias = bias.reshape(1, Cout).astype(jnp.float32)

    if stride == 1:
        # Padded rows must cover the last row tile's taps.
        Hb, Wb = n_row_tiles * TR + 2, Wslice + 2
        xp = jnp.pad(x, ((0, 0), (1, Hb - H - 1), (1, Wb - W - 1), (0, 0)))
        xph = xp.reshape(N, 1, Hb, Wb, Cin)
        P = 1
        taps = tuple((0, kh, kw) for kh in range(3) for kw in range(3))
    elif stride == 2:
        # Space-to-depth phase decomposition: every tap becomes a stride-1,
        # contiguous in-kernel slice (one extra pass over x in HBM vs the 9x
        # read amplification of a materialized im2col).
        Hb, Wb = n_row_tiles * TR + 1, Wslice + 1
        Hp, Wp = 2 * Hb, 2 * Wb
        xp = jnp.pad(x, ((0, 0), (1, Hp - H - 1), (1, Wp - W - 1), (0, 0)))
        xph = xp.reshape(N, Hb, 2, Wb, 2, Cin).transpose(0, 2, 4, 1, 3, 5)
        xph = xph.reshape(N, 4, Hb, Wb, Cin)
        P = 4
        taps = tuple((2 * (kh & 1) + (kw & 1), kh >> 1, kw >> 1)
                     for kh in range(3) for kw in range(3))
    else:
        raise NotImplementedError("stride must be 1 or 2")

    vmem_limit, _ = _tpu_budget()
    kernel = functools.partial(_conv3x3_kernel, taps=taps, TR=TR,
                               Wout=Wout, Wslice=Wslice)
    bytes_accessed = (int(xph.size) * 2 + int(w.size) * 2
                      + int(N * Hout * Wout * Cout) * 2)
    out = pl.pallas_call(
        kernel,
        out_shape=jax.ShapeDtypeStruct((N, Hout, Wout, Cout), jnp.bfloat16),
        grid=(N, n_row_tiles),
        in_specs=[
            # Whole (phase-decomposed, padded) image: fetched once per batch
            # element, revisited across the row-tile axis.
            pl.BlockSpec((1, P, Hb, Wb, Cin), lambda n, t: (n, 0, 0, 0, 0)),
            pl.BlockSpec((9, Cin, Cout), lambda n, t: (0, 0, 0)),
            pl.BlockSpec((1, Cout), lambda n, t: (0, 0)),
        ],
        out_specs=pl.BlockSpec((1, TR, Wout, Cout), lambda n, t: (n, t, 0, 0)),
        compiler_params=pltpu.CompilerParams(
            dimension_semantics=("parallel", "parallel"),
            vmem_limit_bytes=vmem_limit),
        cost_estimate=pl.CostEstimate(
            flops=2 * N * n_row_tiles * TR * Wslice * 9 * Cin * Cout,
            transcendentals=0, bytes_accessed=bytes_accessed),
    )(xph, w, bias)
    return out, Hout, Wout


# ----------------------------------------------------------------------------
# Parameters (deterministic init) and forward pass
# ----------------------------------------------------------------------------
def init_bottleneck_params(key, inplanes, planes, stride=1, groups=1,
                           base_width=64):
    expansion = 4
    width = int(planes * (base_width / 64.0)) * groups
    ks = jax.random.split(key, 4)

    def bn_params(c):
        return dict(
            gamma=1.0 + 0.05 * jnp.arange(c, dtype=jnp.float32),
            beta=0.02 * jnp.arange(c, dtype=jnp.float32) - 0.1,
            mean=0.01 * jnp.arange(c, dtype=jnp.float32),
            var=1.0 + 0.03 * jnp.arange(c, dtype=jnp.float32))

    p = {}
    p['w1'] = 0.1 * jax.random.normal(ks[0], (width, inplanes, 1, 1), jnp.float32)
    p['bn1'] = bn_params(width)
    p['w2'] = 0.1 * jax.random.normal(ks[1], (width, width // groups, 3, 3), jnp.float32)
    p['bn2'] = bn_params(width)
    p['w3'] = 0.1 * jax.random.normal(ks[2], (expansion * planes, width, 1, 1), jnp.float32)
    p['bn3'] = bn_params(expansion * planes)
    if stride != 1 or inplanes != expansion * planes:
        p['wd'] = 0.1 * jax.random.normal(ks[3], (expansion * planes, inplanes, 1, 1), jnp.float32)
        p['bnd'] = bn_params(expansion * planes)
    return p


def bottleneck_forward(x_nchw, p, stride=1, groups=1, eps=1e-5):
    x = jnp.transpose(x_nchw, (0, 2, 3, 1))          # NCHW -> NHWC
    N, H, W, Cin = x.shape
    x_bf = x.astype(jnp.bfloat16)

    def fold(bn):
        s = bn['gamma'] * jax.lax.rsqrt(bn['var'] + eps)
        return s, bn['beta'] - bn['mean'] * s

    # conv1 (1x1) + bn1 + relu
    s1, b1 = fold(p['bn1'])
    w1 = (p['w1'][:, :, 0, 0].T * s1[None, :]).astype(jnp.bfloat16)   # (Cin, width)
    width = w1.shape[1]
    y1 = fused_matmul_bias(x_bf.reshape(-1, Cin), w1, b1, relu=True)
    y1 = y1.reshape(N, H, W, width)

    # conv2 (3x3, stride, groups, pad=1) + bn2 + relu — fused, row-tiled grid
    s2, b2 = fold(p['bn2'])
    y2, Hout, Wout = conv3x3_bn_relu(y1, p['w2'], s2, b2,
                                     stride=stride, groups=groups)

    # identity / downsample (1x1 strided conv + bn, no relu)
    cout = p['w3'].shape[0]
    if 'wd' in p:
        sd, bd = fold(p['bnd'])
        wd = (p['wd'][:, :, 0, 0].T * sd[None, :]).astype(jnp.bfloat16)
        # TODO(synk): fold the stride-2 selection into the matmul kernel via
        # strided ref loads instead of this XLA strided-slice HBM pass.
        xs = x_bf[:, ::stride, ::stride, :].reshape(-1, Cin)
        identity = fused_matmul_bias(xs, wd, bd, relu=False)
    else:
        identity = x_bf.reshape(-1, Cin)

    # conv3 (1x1) + bn3 + residual add + relu — single fused kernel, bf16 store
    s3, b3 = fold(p['bn3'])
    w3 = (p['w3'][:, :, 0, 0].T * s3[None, :]).astype(jnp.bfloat16)
    y3 = fused_matmul_bias(y2.reshape(-1, width), w3, b3, relu=True,
                           residual=identity, out_dtype=jnp.bfloat16)
    y3 = y3.reshape(N, Hout, Wout, cout)
    # NHWC bf16 -> NCHW f32 at the module boundary (half the transpose bytes).
    return jnp.transpose(y3, (0, 3, 1, 2)).astype(jnp.float32)


# ----------------------------------------------------------------------------
# Pure-JAX reference (lax.conv, f32) for correctness check
# ----------------------------------------------------------------------------
def ref_bottleneck(x, p, stride, groups, eps=1e-5):
    def conv(xx, w, s, g=1, pad=0):
        return jax.lax.conv_general_dilated(
            xx, w, (s, s), [(pad, pad), (pad, pad)],
            dimension_numbers=('NCHW', 'OIHW', 'NCHW'),
            feature_group_count=g)

    def bn(xx, bnp):
        sc = bnp['gamma'] / jnp.sqrt(bnp['var'] + eps)
        bi = bnp['beta'] - bnp['mean'] * sc
        return xx * sc[None, :, None, None] + bi[None, :, None, None]

    out = jax.nn.relu(bn(conv(x, p['w1'], 1), p['bn1']))
    out = jax.nn.relu(bn(conv(out, p['w2'], stride, groups, pad=1), p['bn2']))
    out = bn(conv(out, p['w3'], 1), p['bn3'])
    identity = bn(conv(x, p['wd'], stride), p['bnd']) if 'wd' in p else x
    return jax.nn.relu(out + identity)


if __name__ == "__main__":
    key = jax.random.PRNGKey(0)
    kx, kp = jax.random.split(key)

    inplanes, planes, stride, groups = 16, 8, 2, 1   # width=8, out channels=32
    x = jax.random.normal(kx, (2, inplanes, 16, 16), jnp.float32)  # NCHW input

    params = init_bottleneck_params(kp, inplanes, planes, stride, groups)

    fwd = jax.jit(functools.partial(bottleneck_forward, stride=stride, groups=groups))
    out = jax.block_until_ready(fwd(x, params))

    ref = ref_bottleneck(x, params, stride, groups)
    assert out.shape == (2, 4 * planes, 8, 8), out.shape
    rel = float(jnp.max(jnp.abs(out - ref)) / (jnp.max(jnp.abs(ref)) + 1e-6))
    assert rel < 5e-2, f"relative err {rel}"   # bf16 MXU inputs, f32 accumulation
    print("KERNEL_OK")
</pallas_src>

<mosaic_0001>
module attributes {stable_mosaic.version = 11 : i64} {
  func.func @_mm_bias_kernel(%arg0: i32, %arg1: i32, %arg2: memref<16x16xbf16, #tpu.memory_space<vmem>>, %arg3: memref<16x32xbf16, #tpu.memory_space<vmem>>, %arg4: memref<1x32xf32, #tpu.memory_space<vmem>>, %arg5: memref<16x32xbf16, #tpu.memory_space<vmem>>) attributes {dimension_semantics = [#tpu.dimension_semantics<parallel>, #tpu.dimension_semantics<parallel>], iteration_bounds = array<i64: 1, 8>, scalar_prefetch = 0 : i64, scratch_operands = 0 : i64, tpu.core_type = #tpu.core_type<tc>, window_params = [{transform_indices = @transform_0, window_bounds = array<i64: 16, 16>}, {transform_indices = @transform_1, window_bounds = array<i64: 16, 32>}, {transform_indices = @transform_2, window_bounds = array<i64: 1, 32>}, {transform_indices = @transform_3, window_bounds = array<i64: 16, 32>}]} {
    %c0 = arith.constant 0 : index
    %c0_0 = arith.constant 0 : index
    %0 = vector.load %arg2[%c0, %c0_0] : memref<16x16xbf16, #tpu.memory_space<vmem>>, vector<16x16xbf16>
    %c0_1 = arith.constant 0 : index
    %c0_2 = arith.constant 0 : index
    %1 = vector.load %arg3[%c0_1, %c0_2] : memref<16x32xbf16, #tpu.memory_space<vmem>>, vector<16x32xbf16>
    %cst = arith.constant dense<0.000000e+00> : vector<16x32xf32>
    %2 = tpu.matmul %0, %1, %cst {dimension_numbers = #tpu.dot_dimension_numbers<[1], [0], [0], [1], [0, 0, 1, 1], [], []>} : vector<16x16xbf16>, vector<16x32xbf16>, vector<16x32xf32> -> vector<16x32xf32>
    %c0_3 = arith.constant 0 : index
    %c0_4 = arith.constant 0 : index
    %3 = vector.load %arg4[%c0_3, %c0_4] : memref<1x32xf32, #tpu.memory_space<vmem>>, vector<1x32xf32>
    %4 = vector.broadcast %3 : vector<1x32xf32> to vector<16x32xf32>
    %5 = arith.addf %2, %4 : vector<16x32xf32>
    %6 = arith.truncf %5 : vector<16x32xf32> to vector<16x32xbf16>
    %c0_5 = arith.constant 0 : index
    %c0_6 = arith.constant 0 : index
    %7 = vector.load %arg5[%c0_5, %c0_6] : memref<16x32xbf16, #tpu.memory_space<vmem>>, vector<16x32xbf16>
    tpu.vector_store %arg5[%c0_5, %c0_6], %6 {strides = array<i32>} : memref<16x32xbf16, #tpu.memory_space<vmem>>, vector<16x32xbf16>,
    return
  }
  func.func @transform_0(%arg0: i32, %arg1: i32) -> (i32, i32) {
    %c0_i32 = arith.constant 0 : i32
    %c0_i32_0 = arith.constant 0 : i32
    return %arg1, %c0_i32 : i32, i32
  }
  func.func @transform_1(%arg0: i32, %arg1: i32) -> (i32, i32) {
    %c0_i32 = arith.constant 0 : i32
    %c0_i32_0 = arith.constant 0 : i32
    return %c0_i32, %arg0 : i32, i32
  }
  func.func @transform_2(%arg0: i32, %arg1: i32) -> (i32, i32) {
    %c0_i32 = arith.constant 0 : i32
    %c0_i32_0 = arith.constant 0 : i32
    return %c0_i32, %arg0 : i32, i32
  }
  func.func @transform_3(%arg0: i32, %arg1: i32) -> (i32, i32) {
    %c0_i32 = arith.constant 0 : i32
    return %arg1, %arg0 : i32, i32
  }
}

module attributes {stable_mosaic.version = 11 : i64} {
  func.func @_mm_bias_kernel(%arg0: i32, %arg1: i32, %arg2: memref<64x16xbf16, #tpu.memory_space<vmem>>, %arg3: memref<16x8xbf16, #tpu.memory_space<vmem>>, %arg4: memref<1x8xf32, #tpu.memory_space<vmem>>, %arg5: memref<64x8xbf16, #tpu.memory_space<vmem>>) attributes {dimension_semantics = [#tpu.dimension_semantics<parallel>, #tpu.dimension_semantics<parallel>], iteration_bounds = array<i64: 1, 8>, scalar_prefetch = 0 : i64, scratch_operands = 0 : i64, tpu.core_type = #tpu.core_type<tc>, window_params = [{transform_indices = @transform_0, window_bounds = array<i64: 64, 16>}, {transform_indices = @transform_1, window_bounds = array<i64: 16, 8>}, {transform_indices = @transform_2, window_bounds = array<i64: 1, 8>}, {transform_indices = @transform_3, window_bounds = array<i64: 64, 8>}]} {
    %c0 = arith.constant 0 : index
    %c0_0 = arith.constant 0 : index
    %0 = vector.load %arg2[%c0, %c0_0] : memref<64x16xbf16, #tpu.memory_space<vmem>>, vector<64x16xbf16>
    %c0_1 = arith.constant 0 : index
    %c0_2 = arith.constant 0 : index
    %1 = vector.load %arg3[%c0_1, %c0_2] : memref<16x8xbf16, #tpu.memory_space<vmem>>, vector<16x8xbf16>
    %cst = arith.constant dense<0.000000e+00> : vector<64x8xf32>
    %2 = tpu.matmul %0, %1, %cst {dimension_numbers = #tpu.dot_dimension_numbers<[1], [0], [0], [1], [0, 0, 1, 1], [], []>} : vector<64x16xbf16>, vector<16x8xbf16>, vector<64x8xf32> -> vector<64x8xf32>
    %c0_3 = arith.constant 0 : index
    %c0_4 = arith.constant 0 : index
    %3 = vector.load %arg4[%c0_3, %c0_4] : memref<1x8xf32, #tpu.memory_space<vmem>>, vector<1x8xf32>
    %4 = vector.broadcast %3 : vector<1x8xf32> to vector<64x8xf32>
    %5 = arith.addf %2, %4 : vector<64x8xf32>
    %cst_5 = arith.constant 0.000000e+00 : f32
    %6 = vector.broadcast %cst_5 : f32 to vector<64x8xf32>
    %7 = arith.maximumf %5, %6 : vector<64x8xf32>
    %8 = arith.truncf %7 : vector<64x8xf32> to vector<64x8xbf16>
    %c0_6 = arith.constant 0 : index
    %c0_7 = arith.constant 0 : index
    %9 = vector.load %arg5[%c0_6, %c0_7] : memref<64x8xbf16, #tpu.memory_space<vmem>>, vector<64x8xbf16>
    tpu.vector_store %arg5[%c0_6, %c0_7], %8 {strides = array<i32>} : memref<64x8xbf16, #tpu.memory_space<vmem>>, vector<64x8xbf16>,
    return
  }
  func.func @transform_0(%arg0: i32, %arg1: i32) -> (i32, i32) {
    %c0_i32 = arith.constant 0 : i32
    %c0_i32_0 = arith.constant 0 : i32
    return %arg1, %c0_i32 : i32, i32
  }
  func.func @transform_1(%arg0: i32, %arg1: i32) -> (i32, i32) {
    %c0_i32 = arith.constant 0 : i32
    %c0_i32_0 = arith.constant 0 : i32
    return %c0_i32, %arg0 : i32, i32
  }
  func.func @transform_2(%arg0: i32, %arg1: i32) -> (i32, i32) {
    %c0_i32 = arith.constant 0 : i32
    %c0_i32_0 = arith.constant 0 : i32
    return %c0_i32, %arg0 : i32, i32
  }
  func.func @transform_3(%arg0: i32, %arg1: i32) -> (i32, i32) {
    %c0_i32 = arith.constant 0 : i32
    return %arg1, %arg0 : i32, i32
  }
}

module attributes {stable_mosaic.version = 11 : i64} {
  func.func @_conv3x3_kernel(%arg0: i32, %arg1: i32, %arg2: memref<1x4x9x17x8xbf16, #tpu.memory_space<vmem>>, %arg3: memref<9x8x8xbf16, #tpu.memory_space<vmem>>, %arg4: memref<1x8xf32, #tpu.memory_space<vmem>>, %arg5: memref<1x2x8x8xbf16, #tpu.memory_space<vmem>>) attributes {dimension_semantics = [#tpu.dimension_semantics<parallel>, #tpu.dimension_semantics<parallel>], iteration_bounds = array<i64: 2, 4>, scalar_prefetch = 0 : i64, scratch_operands = 0 : i64, tpu.core_type = #tpu.core_type<tc>, window_params = [{transform_indices = @transform_0, window_bounds = array<i64: 1, 4, 9, 17, 8>}, {pipeline_mode = #tpu.pipeline_mode<synchronous>, transform_indices = @transform_1, window_bounds = array<i64: 9, 8, 8>}, {pipeline_mode = #tpu.pipeline_mode<synchronous>, transform_indices = @transform_2, window_bounds = array<i64: 1, 8>}, {transform_indices = @transform_3, window_bounds = array<i64: 1, 2, 8, 8>}]} {
    %c2_i32 = arith.constant 2 : i32
    %0 = arith.muli %arg1, %c2_i32 : i32
    %1 = tpu.assume_multiple %0, 2 : i32
    %cst = arith.constant 0.000000e+00 : f32
    %2 = vector.broadcast %cst : f32 to vector<32x8xf32>
    %c0_i32 = arith.constant 0 : i32
    %3 = arith.addi %1, %c0_i32 : i32
    %c0 = arith.constant 0 : index
    %c0_0 = arith.constant 0 : index
    %4 = arith.index_cast %3 : i32 to index
    %c0_1 = arith.constant 0 : index
    %c0_2 = arith.constant 0 : index
    %5 = vector.load %arg2[%c0, %c0_0, %4, %c0_1, %c0_2] : memref<1x4x9x17x8xbf16, #tpu.memory_space<vmem>>, vector<1x1x2x16x8xbf16>
    %6 = vector.shape_cast %5 : vector<1x1x2x16x8xbf16> to vector<2x16x8xbf16>
    %7 = vector.shape_cast %6 : vector<2x16x8xbf16> to vector<32x8xbf16>
    %c0_3 = arith.constant 0 : index
    %c0_4 = arith.constant 0 : index
    %c0_5 = arith.constant 0 : index
    %8 = vector.load %arg3[%c0_3, %c0_4, %c0_5] : memref<9x8x8xbf16, #tpu.memory_space<vmem>>, vector<1x8x8xbf16>
    %9 = vector.shape_cast %8 : vector<1x8x8xbf16> to vector<8x8xbf16>
    %cst_6 = arith.constant dense<0.000000e+00> : vector<32x8xf32>
    %10 = tpu.matmul %7, %9, %cst_6 {dimension_numbers = #tpu.dot_dimension_numbers<[1], [0], [0], [1], [0, 0, 1, 1], [], []>} : vector<32x8xbf16>, vector<8x8xbf16>, vector<32x8xf32> -> vector<32x8xf32>
    %11 = arith.addf %2, %10 : vector<32x8xf32>
    %c0_i32_7 = arith.constant 0 : i32
    %12 = arith.addi %1, %c0_i32_7 : i32
    %c0_8 = arith.constant 0 : index
    %c1 = arith.constant 1 : index
    %13 = arith.index_cast %12 : i32 to index
    %c0_9 = arith.constant 0 : index
    %c0_10 = arith.constant 0 : index
    %14 = vector.load %arg2[%c0_8, %c1, %13, %c0_9, %c0_10] : memref<1x4x9x17x8xbf16, #tpu.memory_space<vmem>>, vector<1x1x2x16x8xbf16>
    %15 = vector.shape_cast %14 : vector<1x1x2x16x8xbf16> to vector<2x16x8xbf16>
    %16 = vector.shape_cast %15 : vector<2x16x8xbf16> to vector<32x8xbf16>
    %c1_11 = arith.constant 1 : index
    %c0_12 = arith.constant 0 : index
    %c0_13 = arith.constant 0 : index
    %17 = vector.load %arg3[%c1_11, %c0_12, %c0_13] : memref<9x8x8xbf16, #tpu.memory_space<vmem>>, vector<1x8x8xbf16>
    %18 = vector.shape_cast %17 : vector<1x8x8xbf16> to vector<8x8xbf16>
    %cst_14 = arith.constant dense<0.000000e+00> : vector<32x8xf32>
    %19 = tpu.matmul %16, %18, %cst_14 {dimension_numbers = #tpu.dot_dimension_numbers<[1], [0], [0], [1], [0, 0, 1, 1], [], []>} : vector<32x8xbf16>, vector<8x8xbf16>, vector<32x8xf32> -> vector<32x8xf32>
    %20 = arith.addf %11, %19 : vector<32x8xf32>
    %c0_i32_15 = arith.constant 0 : i32
    %21 = arith.addi %1, %c0_i32_15 : i32
    %c0_16 = arith.constant 0 : index
    %c0_17 = arith.constant 0 : index
    %22 = arith.index_cast %21 : i32 to index
    %c1_18 = arith.constant 1 : index
    %c0_19 = arith.constant 0 : index
    %23 = vector.load %arg2[%c0_16, %c0_17, %22, %c1_18, %c0_19] : memref<1x4x9x17x8xbf16, #tpu.memory_space<vmem>>, vector<1x1x2x16x8xbf16>
    %24 = vector.shape_cast %23 : vector<1x1x2x16x8xbf16> to vector<2x16x8xbf16>
    %25 = vector.shape_cast %24 : vector<2x16x8xbf16> to vector<32x8xbf16>
    %c2 = arith.constant 2 : index
    %c0_20 = arith.constant 0 : index
    %c0_21 = arith.constant 0 : index
    %26 = vector.load %arg3[%c2, %c0_20, %c0_21] : memref<9x8x8xbf16, #tpu.memory_space<vmem>>, vector<1x8x8xbf16>
    %27 = vector.shape_cast %26 : vector<1x8x8xbf16> to vector<8x8xbf16>
    %cst_22 = arith.constant dense<0.000000e+00> : vector<32x8xf32>
    %28 = tpu.matmul %25, %27, %cst_22 {dimension_numbers = #tpu.dot_dimension_numbers<[1], [0], [0], [1], [0, 0, 1, 1], [], []>} : vector<32x8xbf16>, vector<8x8xbf16>, vector<32x8xf32> -> vector<32x8xf32>
    %29 = arith.addf %20, %28 : vector<32x8xf32>
    %c0_i32_23 = arith.constant 0 : i32
    %30 = arith.addi %1, %c0_i32_23 : i32
    %c0_24 = arith.constant 0 : index
    %c2_25 = arith.constant 2 : index
    %31 = arith.index_cast %30 : i32 to index
    %c0_26 = arith.constant 0 : index
    %c0_27 = arith.constant 0 : index
    %32 = vector.load %arg2[%c0_24, %c2_25, %31, %c0_26, %c0_27] : memref<1x4x9x17x8xbf16, #tpu.memory_space<vmem>>, vector<1x1x2x16x8xbf16>
    %33 = vector.shape_cast %32 : vector<1x1x2x16x8xbf16> to vector<2x16x8xbf16>
    %34 = vector.shape_cast %33 : vector<2x16x8xbf16> to vector<32x8xbf16>
    %c3 = arith.constant 3 : index
    %c0_28 = arith.constant 0 : index
    %c0_29 = arith.constant 0 : index
    %35 = vector.load %arg3[%c3, %c0_28, %c0_29] : memref<9x8x8xbf16, #tpu.memory_space<vmem>>, vector<1x8x8xbf16>
    %36 = vector.shape_cast %35 : vector<1x8x8xbf16> to vector<8x8xbf16>
    %cst_30 = arith.constant dense<0.000000e+00> : vector<32x8xf32>
    %37 = tpu.matmul %34, %36, %cst_30 {dimension_numbers = #tpu.dot_dimension_numbers<[1], [0], [0], [1], [0, 0, 1, 1], [], []>} : vector<32x8xbf16>, vector<8x8xbf16>, vector<32x8xf32> -> vector<32x8xf32>
    %38 = arith.addf %29, %37 : vector<32x8xf32>
    %c0_i32_31 = arith.constant 0 : i32
    %39 = arith.addi %1, %c0_i32_31 : i32
    %c0_32 = arith.constant 0 : index
    %c3_33 = arith.constant 3 : index
    %40 = arith.index_cast %39 : i32 to index
    %c0_34 = arith.constant 0 : index
    %c0_35 = arith.constant 0 : index
    %41 = vector.load %arg2[%c0_32, %c3_33, %40, %c0_34, %c0_35] : memref<1x4x9x17x8xbf16, #tpu.memory_space<vmem>>, vector<1x1x2x16x8xbf16>
    %42 = vector.shape_cast %41 : vector<1x1x2x16x8xbf16> to vector<2x16x8xbf16>
    %43 = vector.shape_cast %42 : vector<2x16x8xbf16> to vector<32x8xbf16>
    %c4 = arith.constant 4 : index
    %c0_36 = arith.constant 0 : index
    %c0_37 = arith.constant 0 : index
    %44 = vector.load %arg3[%c4, %c0_36, %c0_37] : memref<9x8x8xbf16, #tpu.memory_space<vmem>>, vector<1x8x8xbf16>
    %45 = vector.shape_cast %44 : vector<1x8x8xbf16> to vector<8x8xbf16>
    %cst_38 = arith.constant dense<0.000000e+00> : vector<32x8xf32>
    %46 = tpu.matmul %43, %45, %cst_38 {dimension_numbers = #tpu.dot_dimension_numbers<[1], [0], [0], [1], [0, 0, 1, 1], [], []>} : vector<32x8xbf16>, vector<8x8xbf16>, vector<32x8xf32> -> vector<32x8xf32>
    %47 = arith.addf %38, %46 : vector<32x8xf32>
    %c0_i32_39 = arith.constant 0 : i32
    %48 = arith.addi %1, %c0_i32_39 : i32
    %c0_40 = arith.constant 0 : index
    %c2_41 = arith.constant 2 : index
    %49 = arith.index_cast %48 : i32 to index
    %c1_42 = arith.constant 1 : index
    %c0_43 = arith.constant 0 : index
    %50 = vector.load %arg2[%c0_40, %c2_41, %49, %c1_42, %c0_43] : memref<1x4x9x17x8xbf16, #tpu.memory_space<vmem>>, vector<1x1x2x16x8xbf16>
    %51 = vector.shape_cast %50 : vector<1x1x2x16x8xbf16> to vector<2x16x8xbf16>
    %52 = vector.shape_cast %51 : vector<2x16x8xbf16> to vector<32x8xbf16>
    %c5 = arith.constant 5 : index
    %c0_44 = arith.constant 0 : index
    %c0_45 = arith.constant 0 : index
    %53 = vector.load %arg3[%c5, %c0_44, %c0_45] : memref<9x8x8xbf16, #tpu.memory_space<vmem>>, vector<1x8x8xbf16>
    %54 = vector.shape_cast %53 : vector<1x8x8xbf16> to vector<8x8xbf16>
    %cst_46 = arith.constant dense<0.000000e+00> : vector<32x8xf32>
    %55 = tpu.matmul %52, %54, %cst_46 {dimension_numbers = #tpu.dot_dimension_numbers<[1], [0], [0], [1], [0, 0, 1, 1], [], []>} : vector<32x8xbf16>, vector<8x8xbf16>, vector<32x8xf32> -> vector<32x8xf32>
    %56 = arith.addf %47, %55 : vector<32x8xf32>
    %c1_i32 = arith.constant 1 : i32
    %57 = arith.addi %1, %c1_i32 : i32
    %c0_47 = arith.constant 0 : index
    %c0_48 = arith.constant 0 : index
    %58 = arith.index_cast %57 : i32 to index
    %c0_49 = arith.constant 0 : index
    %c0_50 = arith.constant 0 : index
    %59 = vector.load %arg2[%c0_47, %c0_48, %58, %c0_49, %c0_50] : memref<1x4x9x17x8xbf16, #tpu.memory_space<vmem>>, vector<1x1x2x16x8xbf16>
    %60 = vector.shape_cast %59 : vector<1x1x2x16x8xbf16> to vector<2x16x8xbf16>
    %61 = vector.shape_cast %60 : vector<2x16x8xbf16> to vector<32x8xbf16>
    %c6 = arith.constant 6 : index
    %c0_51 = arith.constant 0 : index
    %c0_52 = arith.constant 0 : index
    %62 = vector.load %arg3[%c6, %c0_51, %c0_52] : memref<9x8x8xbf16, #tpu.memory_space<vmem>>, vector<1x8x8xbf16>
    %63 = vector.shape_cast %62 : vector<1x8x8xbf16> to vector<8x8xbf16>
    %cst_53 = arith.constant dense<0.000000e+00> : vector<32x8xf32>
    %64 = tpu.matmul %61, %63, %cst_53 {dimension_numbers = #tpu.dot_dimension_numbers<[1], [0], [0], [1], [0, 0, 1, 1], [], []>} : vector<32x8xbf16>, vector<8x8xbf16>, vector<32x8xf32> -> vector<32x8xf32>
    %65 = arith.addf %56, %64 : vector<32x8xf32>
    %c1_i32_54 = arith.constant 1 : i32
    %66 = arith.addi %1, %c1_i32_54 : i32
    %c0_55 = arith.constant 0 : index
    %c1_56 = arith.constant 1 : index
    %67 = arith.index_cast %66 : i32 to index
    %c0_57 = arith.constant 0 : index
    %c0_58 = arith.constant 0 : index
    %68 = vector.load %arg2[%c0_55, %c1_56, %67, %c0_57, %c0_58] : memref<1x4x9x17x8xbf16, #tpu.memory_space<vmem>>, vector<1x1x2x16x8xbf16>
    %69 = vector.shape_cast %68 : vector<1x1x2x16x8xbf16> to vector<2x16x8xbf16>
    %70 = vector.shape_cast %69 : vector<2x16x8xbf16> to vector<32x8xbf16>
    %c7 = arith.constant 7 : index
    %c0_59 = arith.constant 0 : index
    %c0_60 = arith.constant 0 : index
    %71 = vector.load %arg3[%c7, %c0_59, %c0_60] : memref<9x8x8xbf16, #tpu.memory_space<vmem>>, vector<1x8x8xbf16>
    %72 = vector.shape_cast %71 : vector<1x8x8xbf16> to vector<8x8xbf16>
    %cst_61 = arith.constant dense<0.000000e+00> : vector<32x8xf32>
    %73 = tpu.matmul %70, %72, %cst_61 {dimension_numbers = #tpu.dot_dimension_numbers<[1], [0], [0], [1], [0, 0, 1, 1], [], []>} : vector<32x8xbf16>, vector<8x8xbf16>, vector<32x8xf32> -> vector<32x8xf32>
    %74 = arith.addf %65, %73 : vector<32x8xf32>
    %c1_i32_62 = arith.constant 1 : i32
    %75 = arith.addi %1, %c1_i32_62 : i32
    %c0_63 = arith.constant 0 : index
    %c0_64 = arith.constant 0 : index
    %76 = arith.index_cast %75 : i32 to index
    %c1_65 = arith.constant 1 : index
    %c0_66 = arith.constant 0 : index
    %77 = vector.load %arg2[%c0_63, %c0_64, %76, %c1_65, %c0_66] : memref<1x4x9x17x8xbf16, #tpu.memory_space<vmem>>, vector<1x1x2x16x8xbf16>
    %78 = vector.shape_cast %77 : vector<1x1x2x16x8xbf16> to vector<2x16x8xbf16>
    %79 = vector.shape_cast %78 : vector<2x16x8xbf16> to vector<32x8xbf16>
    %c8 = arith.constant 8 : index
    %c0_67 = arith.constant 0 : index
    %c0_68 = arith.constant 0 : index
    %80 = vector.load %arg3[%c8, %c0_67, %c0_68] : memref<9x8x8xbf16, #tpu.memory_space<vmem>>, vector<1x8x8xbf16>
    %81 = vector.shape_cast %80 : vector<1x8x8xbf16> to vector<8x8xbf16>
    %cst_69 = arith.constant dense<0.000000e+00> : vector<32x8xf32>
    %82 = tpu.matmul %79, %81, %cst_69 {dimension_numbers = #tpu.dot_dimension_numbers<[1], [0], [0], [1], [0, 0, 1, 1], [], []>} : vector<32x8xbf16>, vector<8x8xbf16>, vector<32x8xf32> -> vector<32x8xf32>
    %83 = arith.addf %74, %82 : vector<32x8xf32>
    %c0_70 = arith.constant 0 : index
    %c0_71 = arith.constant 0 : index
    %84 = vector.load %arg4[%c0_70, %c0_71] : memref<1x8xf32, #tpu.memory_space<vmem>>, vector<1x8xf32>
    %85 = vector.broadcast %84 : vector<1x8xf32> to vector<32x8xf32>
    %86 = arith.addf %83, %85 : vector<32x8xf32>
    %cst_72 = arith.constant 0.000000e+00 : f32
    %87 = vector.broadcast %cst_72 : f32 to vector<32x8xf32>
    %88 = arith.maximumf %86, %87 : vector<32x8xf32>
    %89 = vector.shape_cast %88 : vector<32x8xf32> to vector<2x16x8xf32>
    %90 = vector.extract_strided_slice %89 {offsets = [0, 0, 0], sizes = [2, 8, 8], strides = [1, 1, 1]} : vector<2x16x8xf32> to vector<2x8x8xf32>
    %91 = arith.truncf %90 : vector<2x8x8xf32> to vector<2x8x8xbf16>
    %c0_73 = arith.constant 0 : index
    %c0_74 = arith.constant 0 : index
    %c0_75 = arith.constant 0 : index
    %c0_76 = arith.constant 0 : index
    %92 = vector.load %arg5[%c0_73, %c0_74, %c0_75, %c0_76] : memref<1x2x8x8xbf16, #tpu.memory_space<vmem>>, vector<1x2x8x8xbf16>
    %93 = vector.shape_cast %92 : vector<1x2x8x8xbf16> to vector<2x8x8xbf16>
    %94 = vector.shape_cast %91 : vector<2x8x8xbf16> to vector<1x2x8x8xbf16>
    tpu.vector_store %arg5[%c0_73, %c0_74, %c0_75, %c0_76], %94 {strides = array<i32>} : memref<1x2x8x8xbf16, #tpu.memory_space<vmem>>, vector<1x2x8x8xbf16>,
    return
  }
  func.func @transform_0(%arg0: i32, %arg1: i32) -> (i32, i32, i32, i32, i32) {
    %c0_i32 = arith.constant 0 : i32
    %c0_i32_0 = arith.constant 0 : i32
    %c0_i32_1 = arith.constant 0 : i32
    %c0_i32_2 = arith.constant 0 : i32
    %c0_i32_3 = arith.constant 0 : i32
    return %arg0, %c0_i32, %c0_i32_0, %c0_i32_1, %c0_i32_2 : i32, i32, i32, i32, i32
  }
  func.func @transform_1(%arg0: i32, %arg1: i32) -> (i32, i32, i32) {
    %c0_i32 = arith.constant 0 : i32
    %c0_i32_0 = arith.constant 0 : i32
    %c0_i32_1 = arith.constant 0 : i32
    %c0_i32_2 = arith.constant 0 : i32
    return %c0_i32, %c0_i32_0, %c0_i32_1 : i32, i32, i32
  }
  func.func @transform_2(%arg0: i32, %arg1: i32) -> (i32, i32) {
    %c0_i32 = arith.constant 0 : i32
    %c0_i32_0 = arith.constant 0 : i32
    %c0_i32_1 = arith.constant 0 : i32
    return %c0_i32, %c0_i32_0 : i32, i32
  }
  func.func @transform_3(%arg0: i32, %arg1: i32) -> (i32, i32, i32, i32) {
    %c0_i32 = arith.constant 0 : i32
    %c0_i32_0 = arith.constant 0 : i32
    %c0_i32_1 = arith.constant 0 : i32
    return %arg0, %arg1, %c0_i32, %c0_i32_0 : i32, i32, i32, i32
  }
}

module attributes {stable_mosaic.version = 11 : i64} {
  func.func @_mm_bias_kernel(%arg0: i32, %arg1: i32, %arg2: memref<16x8xbf16, #tpu.memory_space<vmem>>, %arg3: memref<8x32xbf16, #tpu.memory_space<vmem>>, %arg4: memref<1x32xf32, #tpu.memory_space<vmem>>, %arg5: memref<16x32xbf16, #tpu.memory_space<vmem>>, %arg6: memref<16x32xbf16, #tpu.memory_space<vmem>>) attributes {dimension_semantics = [#tpu.dimension_semantics<parallel>, #tpu.dimension_semantics<parallel>], iteration_bounds = array<i64: 1, 8>, scalar_prefetch = 0 : i64, scratch_operands = 0 : i64, tpu.core_type = #tpu.core_type<tc>, window_params = [{transform_indices = @transform_0, window_bounds = array<i64: 16, 8>}, {transform_indices = @transform_1, window_bounds = array<i64: 8, 32>}, {transform_indices = @transform_2, window_bounds = array<i64: 1, 32>}, {transform_indices = @transform_3, window_bounds = array<i64: 16, 32>}, {transform_indices = @transform_4, window_bounds = array<i64: 16, 32>}]} {
    %c0 = arith.constant 0 : index
    %c0_0 = arith.constant 0 : index
    %0 = vector.load %arg2[%c0, %c0_0] : memref<16x8xbf16, #tpu.memory_space<vmem>>, vector<16x8xbf16>
    %c0_1 = arith.constant 0 : index
    %c0_2 = arith.constant 0 : index
    %1 = vector.load %arg3[%c0_1, %c0_2] : memref<8x32xbf16, #tpu.memory_space<vmem>>, vector<8x32xbf16>
    %cst = arith.constant dense<0.000000e+00> : vector<16x32xf32>
    %2 = tpu.matmul %0, %1, %cst {dimension_numbers = #tpu.dot_dimension_numbers<[1], [0], [0], [1], [0, 0, 1, 1], [], []>} : vector<16x8xbf16>, vector<8x32xbf16>, vector<16x32xf32> -> vector<16x32xf32>
    %c0_3 = arith.constant 0 : index
    %c0_4 = arith.constant 0 : index
    %3 = vector.load %arg4[%c0_3, %c0_4] : memref<1x32xf32, #tpu.memory_space<vmem>>, vector<1x32xf32>
    %4 = vector.broadcast %3 : vector<1x32xf32> to vector<16x32xf32>
    %5 = arith.addf %2, %4 : vector<16x32xf32>
    %c0_5 = arith.constant 0 : index
    %c0_6 = arith.constant 0 : index
    %6 = vector.load %arg5[%c0_5, %c0_6] : memref<16x32xbf16, #tpu.memory_space<vmem>>, vector<16x32xbf16>
    %7 = arith.extf %6 : vector<16x32xbf16> to vector<16x32xf32>
    %8 = arith.addf %5, %7 : vector<16x32xf32>
    %cst_7 = arith.constant 0.000000e+00 : f32
    %9 = vector.broadcast %cst_7 : f32 to vector<16x32xf32>
    %10 = arith.maximumf %8, %9 : vector<16x32xf32>
    %11 = arith.truncf %10 : vector<16x32xf32> to vector<16x32xbf16>
    %c0_8 = arith.constant 0 : index
    %c0_9 = arith.constant 0 : index
    %12 = vector.load %arg6[%c0_8, %c0_9] : memref<16x32xbf16, #tpu.memory_space<vmem>>, vector<16x32xbf16>
    tpu.vector_store %arg6[%c0_8, %c0_9], %11 {strides = array<i32>} : memref<16x32xbf16, #tpu.memory_space<vmem>>, vector<16x32xbf16>,
    return
  }
  func.func @transform_0(%arg0: i32, %arg1: i32) -> (i32, i32) {
    %c0_i32 = arith.constant 0 : i32
    %c0_i32_0 = arith.constant 0 : i32
    return %arg1, %c0_i32 : i32, i32
  }
  func.func @transform_1(%arg0: i32, %arg1: i32) -> (i32, i32) {
    %c0_i32 = arith.constant 0 : i32
    %c0_i32_0 = arith.constant 0 : i32
    return %c0_i32, %arg0 : i32, i32
  }
  func.func @transform_2(%arg0: i32, %arg1: i32) -> (i32, i32) {
    %c0_i32 = arith.constant 0 : i32
    %c0_i32_0 = arith.constant 0 : i32
    return %c0_i32, %arg0 : i32, i32
  }
  func.func @transform_3(%arg0: i32, %arg1: i32) -> (i32, i32) {
    %c0_i32 = arith.constant 0 : i32
    return %arg1, %arg0 : i32, i32
  }
  func.func @transform_4(%arg0: i32, %arg1: i32) -> (i32, i32) {
    %c0_i32 = arith.constant 0 : i32
    return %arg1, %arg0 : i32, i32
  }
}

</mosaic_0001>

<llo_original>
// kernel: bottleneck_forward.4
$region0: #{bottleneck_forward.4}
  #allocation0 [shape = 'u32[]', space=smem, size = 0x4, offset = 0x4, fixed_abs, tag = 'smem constant byte address 0x4 - core index']
  #allocation1 [shape = 'u32[72,128]{1,0:T(1,128)}', space=vmem, size = 0x9000, scoped, tag = 'internal scratch']
  %s0 = inlined_call_operand.vmem [shape: bf16[512,16], index: 0, kind: input, shape index: {}]
  %s1 = inlined_call_operand.vmem [shape: bf16[16,8], index: 1, kind: input, shape index: {}]
  %s2 = inlined_call_operand.vmem [shape: f32[1,8], index: 2, kind: input, shape index: {}]
  %s3 = inlined_call_operand.vmem [shape: bf16[512,8], index: 3, kind: output, shape index: {}]
  %s4 = sld [smem:[#allocation0]]
  $region45: #{bottleneck_forward.4} parent=0
    _
  %s6 = ssub.s32 1, %s4
  %s7 = scalar_select 0, %s6, %s4
  loop: start=0, step=1, limit=10
  $region2: #{bottleneck_forward.4} parent=0 // loop_pre_header
    _
  $region3: #{bottleneck_forward.4} parent=0 // loop_header
    %s9 = sphi 0, %s13
    %p10 = scmp.ge.s32.totalorder %s9, 10
    %s16 = sphi 0, %s28
    %s17 = sphi 0, %s24
    %s18 = sphi 0, %s16
    %s19 = sphi 0, %s17
    %s20 = sphi 0, %s18
    %s21 = sphi 0, %s19
    %s31 = sphi 0, %s33
    %s34 = sphi 0, %s31
    %s35 = sphi 0, %s34
    %s51 = sphi 0, %s35
    %s57 = sphi 0, %s59
    %s60 = sphi 0, %s57
    %s61 = sphi 0, %s60
    %s77 = sphi 0, %s61
    %s83 = sphi 0, %s85
    %s86 = sphi 0, %s83
    %s87 = sphi 0, %s86
    %s103 = sphi 0, %s87
    %s111 = sphi 0, %s113
    %s114 = sphi 0, %s111
    %s115 = sphi 0, %s114
    %s131 = sphi 0, %s115
  $region4: #{bottleneck_forward.4} parent=0 // loop_header_branch
    %12 = sbr.rel (%p10) target = $region8
  $region5: #{bottleneck_forward.4} parent=0 // loop_body
    %s14 = ssub.s32 %s9, 1
    %s15 = ssub.s32 %s9, 2
    %s22 = sadd.s32 1, %s17
    %p23 = scmp.ge.s32.totalorder %s22, 8
    %s24 = scalar_select %p23, 0, %s22
    %s25 = sadd.s32 1, %s16
    %s26 = scalar_select %p23, %s25, %s16
    %p27 = scmp.ge.s32.totalorder %s26, 1
    %s28 = scalar_select %p27, 0, %s26
    %s29 = ssub.s32 %s17, %s24
    %p30 = scmp.eq.s32.totalorder %s29, 0
    %s32 = sadd.s32 %s31, 1
    %s33 = scalar_select %p30, %s31, %s32
    %p36 = pneg %p30
    %p37 = scmp.eq.s32.totalorder %s9, 7
    %p38 = por %p36, %p37
    %p39 = scmp.ne.s32.totalorder %s31, %s34
    %p40 = scmp.eq.s32.totalorder %s9, 0
    %p41 = por %p39, %p40
    %p42 = scmp.ne.s32.totalorder %s31, %s34
    %p43 = scmp.eq.s32.totalorder %s14, 7
    %p44 = por %p42, %p43
    %p45 = scmp.ne.s32.totalorder %s34, %s35
    %p46 = scmp.eq.s32.totalorder %s14, 0
    %p47 = por %p45, %p46
    %p48 = scmp.ne.s32.totalorder %s34, %s35
    %p49 = scmp.eq.s32.totalorder %s15, 7
    %p50 = por %p48, %p49
    %p52 = scmp.ne.s32.totalorder %s35, %s51
    %p53 = scmp.eq.s32.totalorder %s15, 0
    %p54 = por %p52, %p53
    %s55 = ssub.s32 %s16, %s28
    %p56 = scmp.eq.s32.totalorder %s55, 0
    %s58 = sadd.s32 %s57, 1
    %s59 = scalar_select %p56, %s57, %s58
    %p62 = pneg %p56
    %p63 = scmp.eq.s32.totalorder %s9, 7
    %p64 = por %p62, %p63
    %p65 = scmp.ne.s32.totalorder %s57, %s60
    %p66 = scmp.eq.s32.totalorder %s9, 0
    %p67 = por %p65, %p66
    %p68 = scmp.ne.s32.totalorder %s57, %s60
    %p69 = scmp.eq.s32.totalorder %s14, 7
    %p70 = por %p68, %p69
    %p71 = scmp.ne.s32.totalorder %s60, %s61
    %p72 = scmp.eq.s32.totalorder %s14, 0
    %p73 = por %p71, %p72
    %p74 = scmp.ne.s32.totalorder %s60, %s61
    %p75 = scmp.eq.s32.totalorder %s15, 7
    %p76 = por %p74, %p75
    %p78 = scmp.ne.s32.totalorder %s61, %s77
    %p79 = scmp.eq.s32.totalorder %s15, 0
    %p80 = por %p78, %p79
    %s81 = ssub.s32 %s16, %s28
    %p82 = scmp.eq.s32.totalorder %s81, 0
    %s84 = sadd.s32 %s83, 1
    %s85 = scalar_select %p82, %s83, %s84
    %p88 = pneg %p82
    %p89 = scmp.eq.s32.totalorder %s9, 7
    %p90 = por %p88, %p89
    %p91 = scmp.ne.s32.totalorder %s83, %s86
    %p92 = scmp.eq.s32.totalorder %s9, 0
    %p93 = por %p91, %p92
    %p94 = scmp.ne.s32.totalorder %s83, %s86
    %p95 = scmp.eq.s32.totalorder %s14, 7
    %p96 = por %p94, %p95
    %p97 = scmp.ne.s32.totalorder %s86, %s87
    %p98 = scmp.eq.s32.totalorder %s14, 0
    %p99 = por %p97, %p98
    %p100 = scmp.ne.s32.totalorder %s86, %s87
    %p101 = scmp.eq.s32.totalorder %s15, 7
    %p102 = por %p100, %p101
    %p104 = scmp.ne.s32.totalorder %s87, %s103
    %p105 = scmp.eq.s32.totalorder %s15, 0
    %p106 = por %p104, %p105
    %s107 = ssub.s32 %s17, %s24
    %s108 = ssub.s32 %s16, %s28
    %s109 = sor.u32 %s107, %s108
    %p110 = scmp.eq.s32.totalorder %s109, 0
    %s112 = sadd.s32 %s111, 1
    %s113 = scalar_select %p110, %s111, %s112
    %p116 = pneg %p110
    %p117 = scmp.eq.s32.totalorder %s9, 7
    %p118 = por %p116, %p117
    %p119 = scmp.ne.s32.totalorder %s111, %s114
    %p120 = scmp.eq.s32.totalorder %s9, 0
    %p121 = por %p119, %p120
    %p122 = scmp.ne.s32.totalorder %s111, %s114
    %p123 = scmp.eq.s32.totalorder %s14, 7
    %p124 = por %p122, %p123
    %p125 = scmp.ne.s32.totalorder %s114, %s115
    %p126 = scmp.eq.s32.totalorder %s14, 0
    %p127 = por %p125, %p126
    %p128 = scmp.ne.s32.totalorder %s114, %s115
    %p129 = scmp.eq.s32.totalorder %s15, 7
    %p130 = por %p128, %p129
    %p132 = scmp.ne.s32.totalorder %s115, %s131
    %p133 = scmp.eq.s32.totalorder %s15, 0
    %p134 = por %p132, %p133
    %p135 = scmp.le.s32.totalorder 1, %s9
    %p136 = scmp.lt.s32.totalorder %s9, 9
    %p137 = pnand %p135, %p136
    %p138 = pneg %p137
    // Predicated region
    $region9: #{bottleneck_forward.4} parent=5 // pred_check
      _
    $region10: #{bottleneck_forward.4} parent=5 // pred_check_branch
      %140 = sbr.rel (%p137) target = $region12
    $region11: #{bottleneck_forward.4} parent=5 // pred_region
      %s141 = ssub.s32 %s9, 1
      // Predicated region
      $region13: #{bottleneck_forward.4} parent=11 // pred_check
        %p142 = pneg %p73
      $region14: #{bottleneck_forward.4} parent=11 // pred_check_branch
        %144 = sbr.rel (%p142) target = $region16
      $region15: #{bottleneck_forward.4} parent=11 // pred_region
        %p145 = scmp.lt.s32.totalorder %s18, 0
        %s146 = scalar_select %p145, %s18, 0
        %s147 = smul.addr %s146, 4
        %s148 = scalar_lea.vmem %s1, %s147
      $region16: #{bottleneck_forward.4} parent=11 // pred_fallthru
        _
      // Predicated region
      $region17: #{bottleneck_forward.4} parent=11 // pred_check
        %p149 = pneg %p99
      $region18: #{bottleneck_forward.4} parent=11 // pred_check_branch
        %151 = sbr.rel (%p149) target = $region20
      $region19: #{bottleneck_forward.4} parent=11 // pred_region
        %p152 = scmp.lt.s32.totalorder %s18, 0
        %s153 = scalar_select %p152, %s18, 0
        %s154 = scalar_lea.vmem %s2, %s153
      $region20: #{bottleneck_forward.4} parent=11 // pred_fallthru
        _
    $region12: #{bottleneck_forward.4} parent=5 // pred_fallthru
      _
    %p155 = scmp.lt.s32.totalorder %s9, 8
    // Predicated region
    $region21: #{bottleneck_forward.4} parent=5 // pred_check
      %p156 = pneg %p155
    $region22: #{bottleneck_forward.4} parent=5 // pred_check_branch
      %158 = sbr.rel (%p156) target = $region24
    $region23: #{bottleneck_forward.4} parent=5 // pred_region
      // Predicated region
      $region25: #{bottleneck_forward.4} parent=23 // pred_check
        %p159 = pneg %p41
      $region26: #{bottleneck_forward.4} parent=23 // pred_check_branch
        %161 = sbr.rel (%p159) target = $region28
      $region27: #{bottleneck_forward.4} parent=23 // pred_region
        %s162 = smul.u32 8, %s17
        %p163 = scmp.lt.s32.totalorder %s162, 63
        %s164 = scalar_select %p163, %s162, 63
        %s165 = smul.addr %s164, 4
        %s166 = scalar_lea.vmem %s0, %s165
        %s167 = smul.u32 8, %s17
      $region28: #{bottleneck_forward.4} parent=23 // pred_fallthru
        _
    $region24: #{bottleneck_forward.4} parent=5 // pred_fallthru
      _
    %p168 = scmp.le.s32.totalorder 1, %s9
    %p169 = scmp.lt.s32.totalorder %s9, 9
    %p170 = pnand %p168, %p169
    %p171 = pneg %p170
    // Predicated region
    $region29: #{bottleneck_forward.4} parent=5 // pred_check
      _
    $region30: #{bottleneck_forward.4} parent=5 // pred_check_branch
      %173 = sbr.rel (%p170) target = $region32
    $region31: #{bottleneck_forward.4} parent=5 // pred_region
      %s174 = ssub.s32 %s9, 1
      %s175 = smul.u32 8, %s19
      %p176 = scmp.lt.s32.totalorder %s175, 63
      %s177 = scalar_select %p176, %s175, 63
      %s178 = smul.addr %s177, 4
      %s179 = scalar_lea.vmem %s0, %s178
      %p180 = pneg %p47
      %p181 = pneg %p44
      %p182 = scmp.lt.s32.totalorder %s18, 0
      %s183 = scalar_select %p182, %s18, 0
      %s184 = smul.addr %s183, 4
      %s185 = scalar_lea.vmem %s1, %s184
      %p186 = pneg %p73
      %p187 = pneg %p70
      %p188 = scmp.lt.s32.totalorder %s18, 0
      %s189 = scalar_select %p188, %s18, 0
      %s190 = scalar_lea.vmem %s2, %s189
      %p191 = pneg %p99
      %p192 = pneg %p96
      %p193 = pneg %p127
      %p194 = pneg %p124
      %s195 = smul.u32 8, %s19
      %p196 = scmp.lt.s32.totalorder %s195, 63
      %s197 = scalar_select %p196, %s195, 63
      %p198 = scmp.lt.s32.totalorder %s18, 0
      %s199 = scalar_select %p198, %s18, 0
      %s200 = sadd.s32 %s199, %s197
      %s201 = smul.addr %s200, 4
      %s202 = scalar_lea.vmem %s3, %s201
      %s203 = smul.u32 8, %s19
      %p204 = scmp.lt.s32.totalorder %s203, 63
      %s205 = scalar_select %p204, %s203, 63
      %s206 = smul.addr %s205, 4
      %s207 = scalar_lea.vmem %s0, %s206
      %s208 = smul.u32 8, %s19
      %p209 = scmp.lt.s32.totalorder %s18, 0
      %s210 = scalar_select %p209, %s18, 0
      %s211 = smul.addr %s210, 4
      %s212 = scalar_lea.vmem %s1, %s211
      %p213 = scmp.lt.s32.totalorder %s18, 0
      %s214 = scalar_select %p213, %s18, 0
      %s215 = scalar_lea.vmem %s2, %s214
      %s216 = smul.u32 8, %s19
      %p217 = scmp.lt.s32.totalorder %s216, 63
      %s218 = scalar_select %p217, %s216, 63
      %p219 = scmp.lt.s32.totalorder %s18, 0
      %s220 = scalar_select %p219, %s18, 0
      %s221 = sadd.s32 %s220, %s218
      %s222 = smul.addr %s221, 4
      %s223 = scalar_lea.vmem %s3, %s222
      %s224 = smul.u32 8, %s19
      %v226 = vld [vmem:[%s207] sm:$0xf]
      %v227 = vld [vmem:[%s207 + $0x4] sm:$0xf]
      %v228 = vld [vmem:[%s207 + $0x8] sm:$0xf]
      %v229 = vld [vmem:[%s207 + $0xc] sm:$0xf]
      %v230 = vld [vmem:[%s207 + $0x10] sm:$0xf]
      %v231 = vld [vmem:[%s207 + $0x14] sm:$0xf]
      %v232 = vld [vmem:[%s207 + $0x18] sm:$0xf]
      %v233 = vld [vmem:[%s207 + $0x1c] sm:$0xf]
      %v234 = vld [vmem:[%s212] sm:$0xf]
      %v235 = vld [vmem:[%s212 + $0x4] sm:$0xf]
      %v236 = vld [vmem:[%s215] sm:$0x1]
      %v238 = vperm.slane %v236, 0
      %v248 = vunpack.c.l.b16 %v226
      %v249 = vunpack.c.l.b16 %v227
      %v250 = vunpack.c.l.b16 %v228
      %v251 = vunpack.c.l.b16 %v229
      %v252 = vunpack.c.l.b16 %v230
      %v253 = vunpack.c.l.b16 %v231
      %v254 = vunpack.c.l.b16 %v232
      %v255 = vunpack.c.l.b16 %v233
      %v256 = vpack.c.b16 %v249, %v248
      %v257 = vpack.c.b16 %v251, %v250
      %v258 = vpack.c.b16 %v253, %v252
      %v259 = vpack.c.b16 %v255, %v254
      %v262 = vunpack.c.l.b16 %v234
      %v263 = vunpack.c.l.b16 %v235
      %v264 = vpack.c.b16 %v263, %v262
      %vm266 = vcmask 130048
      %v268 = vsel %vm266, %v256, 0
      %v271 = vsel %vm266, %v257, 0
      %v274 = vsel %vm266, %v258, 0
      %v277 = vsel %vm266, %v259, 0
      %279 = vmatpush.bf16.msra.mxu0 0
      %280 = vmatpush.bf16.msra.mxu0 0
      %281 = vmatpush.bf16.msra.mxu0 0
      %282 = vmatpush.bf16.msra.mxu0 0
      %283 = vmatpush.bf16.msra.mxu0 0
      %284 = vmatpush.bf16.msra.mxu0 0
      %285 = vmatpush.bf16.msra.mxu0 0
      %286 = vmatpush.bf16.msra.mxu0 %v264
      %287 = vmatmul.bf16.gmra.mxu0 %v268
      %v288 = vpop.f32.mrf.mxu0
      %v289 = vadd.f32 %v238, %v288
      %v290 = vpop.f32.mrf.mxu0
      %v291 = vadd.f32 %v238, %v290
      %292 = vmatmul.bf16.gmra.mxu0 %v271
      %v293 = vpop.f32.mrf.mxu0
      %v294 = vadd.f32 %v238, %v293
      %v295 = vpop.f32.mrf.mxu0
      %v296 = vadd.f32 %v238, %v295
      %297 = vmatmul.bf16.gmra.mxu0 %v274
      %v298 = vpop.f32.mrf.mxu0
      %v299 = vadd.f32 %v238, %v298
      %v300 = vpop.f32.mrf.mxu0
      %v301 = vadd.f32 %v238, %v300
      %302 = vmatmul.bf16.gmra.mxu0 %v277
      %v303 = vpop.f32.mrf.mxu0
      %v304 = vadd.f32 %v238, %v303
      %v305 = vpop.f32.mrf.mxu0
      %v306 = vadd.f32 %v238, %v305
      %307 = vdwg.mxu0
      %v308 = vmax.f32 %v289, 0.0
      %v309 = vmax.f32 %v291, 0.0
      %v310 = vmax.f32 %v294, 0.0
      %v311 = vmax.f32 %v296, 0.0
      %v312 = vmax.f32 %v299, 0.0
      %v313 = vmax.f32 %v301, 0.0
      %v314 = vmax.f32 %v304, 0.0
      %v315 = vmax.f32 %v306, 0.0
      %v316 = vpack.c.bf16 %v308, %v308
      %v317 = vpack.c.bf16 %v309, %v309
      %v318 = vpack.c.bf16 %v310, %v310
      %v319 = vpack.c.bf16 %v311, %v311
      %v320 = vpack.c.bf16 %v312, %v312
      %v321 = vpack.c.bf16 %v313, %v313
      %v322 = vpack.c.bf16 %v314, %v314
      %v323 = vpack.c.bf16 %v315, %v315
      %vm324 = vcmask 60416
      %325 = vst.msk [vmem:[%s223] sm:$0xf] %vm324, %v316
      %326 = vst.msk [vmem:[%s223 + $0x4] sm:$0xf] %vm324, %v317
      %327 = vst.msk [vmem:[%s223 + $0x8] sm:$0xf] %vm324, %v318
      %328 = vst.msk [vmem:[%s223 + $0xc] sm:$0xf] %vm324, %v319
      %329 = vst.msk [vmem:[%s223 + $0x10] sm:$0xf] %vm324, %v320
      %330 = vst.msk [vmem:[%s223 + $0x14] sm:$0xf] %vm324, %v321
      %331 = vst.msk [vmem:[%s223 + $0x18] sm:$0xf] %vm324, %v322
      %332 = vst.msk [vmem:[%s223 + $0x1c] sm:$0xf] %vm324, %v323
      %s333 = smul.u32 8, %s19
      %p334 = scmp.lt.s32.totalorder %s333, 63
      %s335 = scalar_select %p334, %s333, 63
      %p336 = scmp.lt.s32.totalorder %s18, 0
      %s337 = scalar_select %p336, %s18, 0
      %s338 = sadd.s32 %s337, %s335
      %s339 = smul.addr %s338, 4
      %s340 = scalar_lea.vmem %s3, %s339
      // Predicated region
      $region33: #{bottleneck_forward.4} parent=31 // pred_check
        %p341 = pneg %p124
      $region34: #{bottleneck_forward.4} parent=31 // pred_check_branch
        %343 = sbr.rel (%p341) target = $region36
      $region35: #{bottleneck_forward.4} parent=31 // pred_region
        %s344 = smul.u32 8, %s19
      $region36: #{bottleneck_forward.4} parent=31 // pred_fallthru
        _
    $region32: #{bottleneck_forward.4} parent=5 // pred_fallthru
      _
    %p345 = scmp.le.s32.totalorder 2, %s9
    // Predicated region
    $region37: #{bottleneck_forward.4} parent=5 // pred_check
      %p346 = pneg %p345
    $region38: #{bottleneck_forward.4} parent=5 // pred_check_branch
      %348 = sbr.rel (%p346) target = $region40
    $region39: #{bottleneck_forward.4} parent=5 // pred_region
      %s349 = ssub.s32 %s9, 2
      // Predicated region
      $region41: #{bottleneck_forward.4} parent=39 // pred_check
        %p350 = pneg %p130
      $region42: #{bottleneck_forward.4} parent=39 // pred_check_branch
        %352 = sbr.rel (%p350) target = $region44
      $region43: #{bottleneck_forward.4} parent=39 // pred_region
        %s353 = smul.u32 8, %s21
        %p354 = scmp.lt.s32.totalorder %s353, 63
        %s355 = scalar_select %p354, %s353, 63
        %p356 = scmp.lt.s32.totalorder %s20, 0
        %s357 = scalar_select %p356, %s20, 0
        %s358 = sadd.s32 %s357, %s355
        %s359 = smul.addr %s358, 4
        %s360 = scalar_lea.vmem %s3, %s359
      $region44: #{bottleneck_forward.4} parent=39 // pred_fallthru
        _
    $region40: #{bottleneck_forward.4} parent=5 // pred_fallthru
      _
  $region6: #{bottleneck_forward.4} parent=0 // loop_footer
    %s13 = sadd.s32 1, %s9
  $region7: #{bottleneck_forward.4} parent=0 // loop_footer_branch
    %8 = sbr.rel target = $region3
  $region8: #{bottleneck_forward.4} parent=0 // loop_exit
    _

// kernel: bottleneck_forward.6
$region0: #{bottleneck_forward.6}
  #allocation0 [shape = 'u32[]', space=smem, size = 0x4, offset = 0x4, fixed_abs, tag = 'smem constant byte address 0x4 - core index']
  #allocation1 [shape = 'u32[72,128]{1,0:T(1,128)}', space=vmem, size = 0x9000, scoped, tag = 'internal scratch']
  %s0 = inlined_call_operand.vmem [shape: bf16[128,16], index: 0, kind: input, shape index: {}]
  %s1 = inlined_call_operand.vmem [shape: bf16[16,32], index: 1, kind: input, shape index: {}]
  %s2 = inlined_call_operand.vmem [shape: f32[1,32], index: 2, kind: input, shape index: {}]
  %s3 = inlined_call_operand.vmem [shape: bf16[128,32], index: 3, kind: output, shape index: {}]
  %s4 = sld [smem:[#allocation0]]
  $region45: #{bottleneck_forward.6} parent=0
    _
  %s6 = ssub.s32 1, %s4
  %s7 = scalar_select 0, %s6, %s4
  loop: start=0, step=1, limit=10
  $region2: #{bottleneck_forward.6} parent=0 // loop_pre_header
    _
  $region3: #{bottleneck_forward.6} parent=0 // loop_header
    %s9 = sphi 0, %s13
    %p10 = scmp.ge.s32.totalorder %s9, 10
    %s16 = sphi 0, %s28
    %s17 = sphi 0, %s24
    %s18 = sphi 0, %s16
    %s19 = sphi 0, %s17
    %s20 = sphi 0, %s18
    %s21 = sphi 0, %s19
    %s31 = sphi 0, %s33
    %s34 = sphi 0, %s31
    %s35 = sphi 0, %s34
    %s51 = sphi 0, %s35
    %s57 = sphi 0, %s59
    %s60 = sphi 0, %s57
    %s61 = sphi 0, %s60
    %s77 = sphi 0, %s61
    %s83 = sphi 0, %s85
    %s86 = sphi 0, %s83
    %s87 = sphi 0, %s86
    %s103 = sphi 0, %s87
    %s111 = sphi 0, %s113
    %s114 = sphi 0, %s111
    %s115 = sphi 0, %s114
    %s131 = sphi 0, %s115
  $region4: #{bottleneck_forward.6} parent=0 // loop_header_branch
    %12 = sbr.rel (%p10) target = $region8
  $region5: #{bottleneck_forward.6} parent=0 // loop_body
    %s14 = ssub.s32 %s9, 1
    %s15 = ssub.s32 %s9, 2
    %s22 = sadd.s32 1, %s17
    %p23 = scmp.ge.s32.totalorder %s22, 8
    %s24 = scalar_select %p23, 0, %s22
    %s25 = sadd.s32 1, %s16
    %s26 = scalar_select %p23, %s25, %s16
    %p27 = scmp.ge.s32.totalorder %s26, 1
    %s28 = scalar_select %p27, 0, %s26
    %s29 = ssub.s32 %s17, %s24
    %p30 = scmp.eq.s32.totalorder %s29, 0
    %s32 = sadd.s32 %s31, 1
    %s33 = scalar_select %p30, %s31, %s32
    %p36 = pneg %p30
    %p37 = scmp.eq.s32.totalorder %s9, 7
    %p38 = por %p36, %p37
    %p39 = scmp.ne.s32.totalorder %s31, %s34
    %p40 = scmp.eq.s32.totalorder %s9, 0
    %p41 = por %p39, %p40
    %p42 = scmp.ne.s32.totalorder %s31, %s34
    %p43 = scmp.eq.s32.totalorder %s14, 7
    %p44 = por %p42, %p43
    %p45 = scmp.ne.s32.totalorder %s34, %s35
    %p46 = scmp.eq.s32.totalorder %s14, 0
    %p47 = por %p45, %p46
    %p48 = scmp.ne.s32.totalorder %s34, %s35
    %p49 = scmp.eq.s32.totalorder %s15, 7
    %p50 = por %p48, %p49
    %p52 = scmp.ne.s32.totalorder %s35, %s51
    %p53 = scmp.eq.s32.totalorder %s15, 0
    %p54 = por %p52, %p53
    %s55 = ssub.s32 %s16, %s28
    %p56 = scmp.eq.s32.totalorder %s55, 0
    %s58 = sadd.s32 %s57, 1
    %s59 = scalar_select %p56, %s57, %s58
    %p62 = pneg %p56
    %p63 = scmp.eq.s32.totalorder %s9, 7
    %p64 = por %p62, %p63
    %p65 = scmp.ne.s32.totalorder %s57, %s60
    %p66 = scmp.eq.s32.totalorder %s9, 0
    %p67 = por %p65, %p66
    %p68 = scmp.ne.s32.totalorder %s57, %s60
    %p69 = scmp.eq.s32.totalorder %s14, 7
    %p70 = por %p68, %p69
    %p71 = scmp.ne.s32.totalorder %s60, %s61
    %p72 = scmp.eq.s32.totalorder %s14, 0
    %p73 = por %p71, %p72
    %p74 = scmp.ne.s32.totalorder %s60, %s61
    %p75 = scmp.eq.s32.totalorder %s15, 7
    %p76 = por %p74, %p75
    %p78 = scmp.ne.s32.totalorder %s61, %s77
    %p79 = scmp.eq.s32.totalorder %s15, 0
    %p80 = por %p78, %p79
    %s81 = ssub.s32 %s16, %s28
    %p82 = scmp.eq.s32.totalorder %s81, 0
    %s84 = sadd.s32 %s83, 1
    %s85 = scalar_select %p82, %s83, %s84
    %p88 = pneg %p82
    %p89 = scmp.eq.s32.totalorder %s9, 7
    %p90 = por %p88, %p89
    %p91 = scmp.ne.s32.totalorder %s83, %s86
    %p92 = scmp.eq.s32.totalorder %s9, 0
    %p93 = por %p91, %p92
    %p94 = scmp.ne.s32.totalorder %s83, %s86
    %p95 = scmp.eq.s32.totalorder %s14, 7
    %p96 = por %p94, %p95
    %p97 = scmp.ne.s32.totalorder %s86, %s87
    %p98 = scmp.eq.s32.totalorder %s14, 0
    %p99 = por %p97, %p98
    %p100 = scmp.ne.s32.totalorder %s86, %s87
    %p101 = scmp.eq.s32.totalorder %s15, 7
    %p102 = por %p100, %p101
    %p104 = scmp.ne.s32.totalorder %s87, %s103
    %p105 = scmp.eq.s32.totalorder %s15, 0
    %p106 = por %p104, %p105
    %s107 = ssub.s32 %s17, %s24
    %s108 = ssub.s32 %s16, %s28
    %s109 = sor.u32 %s107, %s108
    %p110 = scmp.eq.s32.totalorder %s109, 0
    %s112 = sadd.s32 %s111, 1
    %s113 = scalar_select %p110, %s111, %s112
    %p116 = pneg %p110
    %p117 = scmp.eq.s32.totalorder %s9, 7
    %p118 = por %p116, %p117
    %p119 = scmp.ne.s32.totalorder %s111, %s114
    %p120 = scmp.eq.s32.totalorder %s9, 0
    %p121 = por %p119, %p120
    %p122 = scmp.ne.s32.totalorder %s111, %s114
    %p123 = scmp.eq.s32.totalorder %s14, 7
    %p124 = por %p122, %p123
    %p125 = scmp.ne.s32.totalorder %s114, %s115
    %p126 = scmp.eq.s32.totalorder %s14, 0
    %p127 = por %p125, %p126
    %p128 = scmp.ne.s32.totalorder %s114, %s115
    %p129 = scmp.eq.s32.totalorder %s15, 7
    %p130 = por %p128, %p129
    %p132 = scmp.ne.s32.totalorder %s115, %s131
    %p133 = scmp.eq.s32.totalorder %s15, 0
    %p134 = por %p132, %p133
    %p135 = scmp.le.s32.totalorder 1, %s9
    %p136 = scmp.lt.s32.totalorder %s9, 9
    %p137 = pnand %p135, %p136
    %p138 = pneg %p137
    // Predicated region
    $region9: #{bottleneck_forward.6} parent=5 // pred_check
      _
    $region10: #{bottleneck_forward.6} parent=5 // pred_check_branch
      %140 = sbr.rel (%p137) target = $region12
    $region11: #{bottleneck_forward.6} parent=5 // pred_region
      %s141 = ssub.s32 %s9, 1
      // Predicated region
      $region13: #{bottleneck_forward.6} parent=11 // pred_check
        %p142 = pneg %p73
      $region14: #{bottleneck_forward.6} parent=11 // pred_check_branch
        %144 = sbr.rel (%p142) target = $region16
      $region15: #{bottleneck_forward.6} parent=11 // pred_region
        %p145 = scmp.lt.s32.totalorder %s18, 0
        %s146 = scalar_select %p145, %s18, 0
        %s147 = smul.addr %s146, 4
        %s148 = scalar_lea.vmem %s1, %s147
      $region16: #{bottleneck_forward.6} parent=11 // pred_fallthru
        _
      // Predicated region
      $region17: #{bottleneck_forward.6} parent=11 // pred_check
        %p149 = pneg %p99
      $region18: #{bottleneck_forward.6} parent=11 // pred_check_branch
        %151 = sbr.rel (%p149) target = $region20
      $region19: #{bottleneck_forward.6} parent=11 // pred_region
        %p152 = scmp.lt.s32.totalorder %s18, 0
        %s153 = scalar_select %p152, %s18, 0
        %s154 = scalar_lea.vmem %s2, %s153
      $region20: #{bottleneck_forward.6} parent=11 // pred_fallthru
        _
    $region12: #{bottleneck_forward.6} parent=5 // pred_fallthru
      _
    %p155 = scmp.lt.s32.totalorder %s9, 8
    // Predicated region
    $region21: #{bottleneck_forward.6} parent=5 // pred_check
      %p156 = pneg %p155
    $region22: #{bottleneck_forward.6} parent=5 // pred_check_branch
      %158 = sbr.rel (%p156) target = $region24
    $region23: #{bottleneck_forward.6} parent=5 // pred_region
      // Predicated region
      $region25: #{bottleneck_forward.6} parent=23 // pred_check
        %p159 = pneg %p41
      $region26: #{bottleneck_forward.6} parent=23 // pred_check_branch
        %161 = sbr.rel (%p159) target = $region28
      $region27: #{bottleneck_forward.6} parent=23 // pred_region
        %s162 = smul.u32 2, %s17
        %p163 = scmp.lt.s32.totalorder %s162, 15
        %s164 = scalar_select %p163, %s162, 15
        %s165 = smul.addr %s164, 4
        %s166 = scalar_lea.vmem %s0, %s165
        %s167 = smul.u32 2, %s17
      $region28: #{bottleneck_forward.6} parent=23 // pred_fallthru
        _
    $region24: #{bottleneck_forward.6} parent=5 // pred_fallthru
      _
    %p168 = scmp.le.s32.totalorder 1, %s9
    %p169 = scmp.lt.s32.totalorder %s9, 9
    %p170 = pnand %p168, %p169
    %p171 = pneg %p170
    // Predicated region
    $region29: #{bottleneck_forward.6} parent=5 // pred_check
      _
    $region30: #{bottleneck_forward.6} parent=5 // pred_check_branch
      %173 = sbr.rel (%p170) target = $region32
    $region31: #{bottleneck_forward.6} parent=5 // pred_region
      %s174 = ssub.s32 %s9, 1
      %s175 = smul.u32 2, %s19
      %p176 = scmp.lt.s32.totalorder %s175, 15
      %s177 = scalar_select %p176, %s175, 15
      %s178 = smul.addr %s177, 4
      %s179 = scalar_lea.vmem %s0, %s178
      %p180 = pneg %p47
      %p181 = pneg %p44
      %p182 = scmp.lt.s32.totalorder %s18, 0
      %s183 = scalar_select %p182, %s18, 0
      %s184 = smul.addr %s183, 4
      %s185 = scalar_lea.vmem %s1, %s184
      %p186 = pneg %p73
      %p187 = pneg %p70
      %p188 = scmp.lt.s32.totalorder %s18, 0
      %s189 = scalar_select %p188, %s18, 0
      %s190 = scalar_lea.vmem %s2, %s189
      %p191 = pneg %p99
      %p192 = pneg %p96
      %p193 = pneg %p127
      %p194 = pneg %p124
      %s195 = smul.u32 2, %s19
      %p196 = scmp.lt.s32.totalorder %s195, 15
      %s197 = scalar_select %p196, %s195, 15
      %p198 = scmp.lt.s32.totalorder %s18, 0
      %s199 = scalar_select %p198, %s18, 0
      %s200 = sadd.s32 %s199, %s197
      %s201 = smul.addr %s200, 4
      %s202 = scalar_lea.vmem %s3, %s201
      %s203 = smul.u32 2, %s19
      %p204 = scmp.lt.s32.totalorder %s203, 15
      %s205 = scalar_select %p204, %s203, 15
      %s206 = smul.addr %s205, 4
      %s207 = scalar_lea.vmem %s0, %s206
      %s208 = smul.u32 2, %s19
      %p209 = scmp.lt.s32.totalorder %s18, 0
      %s210 = scalar_select %p209, %s18, 0
      %s211 = smul.addr %s210, 4
      %s212 = scalar_lea.vmem %s1, %s211
      %p213 = scmp.lt.s32.totalorder %s18, 0
      %s214 = scalar_select %p213, %s18, 0
      %s215 = scalar_lea.vmem %s2, %s214
      %s216 = smul.u32 2, %s19
      %p217 = scmp.lt.s32.totalorder %s216, 15
      %s218 = scalar_select %p217, %s216, 15
      %p219 = scmp.lt.s32.totalorder %s18, 0
      %s220 = scalar_select %p219, %s18, 0
      %s221 = sadd.s32 %s220, %s218
      %s222 = smul.addr %s221, 4
      %s223 = scalar_lea.vmem %s3, %s222
      %s224 = smul.u32 2, %s19
      %v226 = vld [vmem:[%s207] sm:$0xf]
      %v227 = vld [vmem:[%s207 + $0x4] sm:$0xf]
      %v228 = vld [vmem:[%s212] sm:$0xf]
      %v229 = vld [vmem:[%s212 + $0x4] sm:$0xf]
      %v230 = vld [vmem:[%s215] sm:$0x1]
      %v232 = vperm.slane %v230, 0
      %v236 = vunpack.c.l.b16 %v226
      %v237 = vunpack.c.l.b16 %v227
      %v238 = vpack.c.b16 %v237, %v236
      %v241 = vunpack.c.l.b16 %v228
      %v242 = vunpack.c.l.b16 %v229
      %v243 = vpack.c.b16 %v242, %v241
      %vm245 = vcmask 130048
      %v247 = vsel %vm245, %v238, 0
      %249 = vmatpush.bf16.msra.mxu0 0
      %250 = vmatpush.bf16.msra.mxu0 0
      %251 = vmatpush.bf16.msra.mxu0 0
      %252 = vmatpush.bf16.msra.mxu0 0
      %253 = vmatpush.bf16.msra.mxu0 0
      %254 = vmatpush.bf16.msra.mxu0 0
      %255 = vmatpush.bf16.msra.mxu0 0
      %256 = vmatpush.bf16.msra.mxu0 %v243
      %257 = vmatmul.bf16.gmra.mxu0 %v247
      %v258 = vpop.f32.mrf.mxu0
      %v259 = vadd.f32 %v232, %v258
      %v260 = vpop.f32.mrf.mxu0
      %v261 = vadd.f32 %v232, %v260
      %262 = vdwg.mxu0
      %v263 = vpack.c.bf16 %v259, %v259
      %v264 = vpack.c.bf16 %v261, %v261
      %vm265 = vcmask 257024
      %266 = vst.msk [vmem:[%s223] sm:$0xf] %vm265, %v263
      %267 = vst.msk [vmem:[%s223 + $0x4] sm:$0xf] %vm265, %v264
      %s268 = smul.u32 2, %s19
      %p269 = scmp.lt.s32.totalorder %s268, 15
      %s270 = scalar_select %p269, %s268, 15
      %p271 = scmp.lt.s32.totalorder %s18, 0
      %s272 = scalar_select %p271, %s18, 0
      %s273 = sadd.s32 %s272, %s270
      %s274 = smul.addr %s273, 4
      %s275 = scalar_lea.vmem %s3, %s274
      // Predicated region
      $region33: #{bottleneck_forward.6} parent=31 // pred_check
        %p276 = pneg %p124
      $region34: #{bottleneck_forward.6} parent=31 // pred_check_branch
        %278 = sbr.rel (%p276) target = $region36
      $region35: #{bottleneck_forward.6} parent=31 // pred_region
        %s279 = smul.u32 2, %s19
      $region36: #{bottleneck_forward.6} parent=31 // pred_fallthru
        _
    $region32: #{bottleneck_forward.6} parent=5 // pred_fallthru
      _
    %p280 = scmp.le.s32.totalorder 2, %s9
    // Predicated region
    $region37: #{bottleneck_forward.6} parent=5 // pred_check
      %p281 = pneg %p280
    $region38: #{bottleneck_forward.6} parent=5 // pred_check_branch
      %283 = sbr.rel (%p281) target = $region40
    $region39: #{bottleneck_forward.6} parent=5 // pred_region
      %s284 = ssub.s32 %s9, 2
      // Predicated region
      $region41: #{bottleneck_forward.6} parent=39 // pred_check
        %p285 = pneg %p130
      $region42: #{bottleneck_forward.6} parent=39 // pred_check_branch
        %287 = sbr.rel (%p285) target = $region44
      $region43: #{bottleneck_forward.6} parent=39 // pred_region
        %s288 = smul.u32 2, %s21
        %p289 = scmp.lt.s32.totalorder %s288, 15
        %s290 = scalar_select %p289, %s288, 15
        %p291 = scmp.lt.s32.totalorder %s20, 0
        %s292 = scalar_select %p291, %s20, 0
        %s293 = sadd.s32 %s292, %s290
        %s294 = smul.addr %s293, 4
        %s295 = scalar_lea.vmem %s3, %s294
      $region44: #{bottleneck_forward.6} parent=39 // pred_fallthru
        _
    $region40: #{bottleneck_forward.6} parent=5 // pred_fallthru
      _
  $region6: #{bottleneck_forward.6} parent=0 // loop_footer
    %s13 = sadd.s32 1, %s9
  $region7: #{bottleneck_forward.6} parent=0 // loop_footer_branch
    %8 = sbr.rel target = $region3
  $region8: #{bottleneck_forward.6} parent=0 // loop_exit
    _

// kernel: bottleneck_forward.5
$region0: #{bottleneck_forward.5}
  #allocation0 [shape = 'u32[]', space=smem, size = 0x4, offset = 0x4, fixed_abs, tag = 'smem constant byte address 0x4 - core index']
  #allocation1 [shape = 'u32[72,128]{1,0:T(1,128)}', space=vmem, size = 0x9000, scoped, tag = 'internal scratch']
  %s0 = inlined_call_operand.vmem [shape: bf16[2,4,9,17,8], index: 0, kind: input, shape index: {}]
  %s1 = inlined_call_operand.vmem [shape: bf16[9,8,8], index: 1, kind: input, shape index: {}]
  %s2 = inlined_call_operand.vmem [shape: f32[1,8], index: 2, kind: input, shape index: {}]
  %s3 = inlined_call_operand.vmem [shape: bf16[2,8,8,8], index: 3, kind: output, shape index: {}]
  %s4 = sld [smem:[#allocation0]]
  $region45: #{bottleneck_forward.5} parent=0
    _
  %s6 = ssub.s32 1, %s4
  %s7 = scalar_select 0, %s6, %s4
  loop: start=0, step=1, limit=10
  $region2: #{bottleneck_forward.5} parent=0 // loop_pre_header
    _
  $region3: #{bottleneck_forward.5} parent=0 // loop_header
    %s9 = sphi 0, %s13
    %p10 = scmp.ge.s32.totalorder %s9, 10
    %s16 = sphi 0, %s28
    %s17 = sphi 0, %s24
    %s18 = sphi 0, %s16
    %s19 = sphi 0, %s17
    %s20 = sphi 0, %s18
    %s21 = sphi 0, %s19
    %s31 = sphi 0, %s33
    %s34 = sphi 0, %s31
    %s35 = sphi 0, %s34
    %s51 = sphi 0, %s35
    %s55 = sphi 0, %s55
    %s57 = sphi 0, %s55
    %s58 = sphi 0, %s57
    %s72 = sphi 0, %s58
    %s76 = sphi 0, %s76
    %s78 = sphi 0, %s76
    %s79 = sphi 0, %s78
    %s93 = sphi 0, %s79
    %s101 = sphi 0, %s103
    %s104 = sphi 0, %s101
    %s105 = sphi 0, %s104
    %s121 = sphi 0, %s105
  $region4: #{bottleneck_forward.5} parent=0 // loop_header_branch
    %12 = sbr.rel (%p10) target = $region8
  $region5: #{bottleneck_forward.5} parent=0 // loop_body
    %s14 = ssub.s32 %s9, 1
    %s15 = ssub.s32 %s9, 2
    %s22 = sadd.s32 1, %s17
    %p23 = scmp.ge.s32.totalorder %s22, 4
    %s24 = scalar_select %p23, 0, %s22
    %s25 = sadd.s32 1, %s16
    %s26 = scalar_select %p23, %s25, %s16
    %p27 = scmp.ge.s32.totalorder %s26, 2
    %s28 = scalar_select %p27, 0, %s26
    %s29 = ssub.s32 %s16, %s28
    %p30 = scmp.eq.s32.totalorder %s29, 0
    %s32 = sadd.s32 %s31, 1
    %s33 = scalar_select %p30, %s31, %s32
    %p36 = pneg %p30
    %p37 = scmp.eq.s32.totalorder %s9, 7
    %p38 = por %p36, %p37
    %p39 = scmp.ne.s32.totalorder %s31, %s34
    %p40 = scmp.eq.s32.totalorder %s9, 0
    %p41 = por %p39, %p40
    %p42 = scmp.ne.s32.totalorder %s31, %s34
    %p43 = scmp.eq.s32.totalorder %s14, 7
    %p44 = por %p42, %p43
    %p45 = scmp.ne.s32.totalorder %s34, %s35
    %p46 = scmp.eq.s32.totalorder %s14, 0
    %p47 = por %p45, %p46
    %p48 = scmp.ne.s32.totalorder %s34, %s35
    %p49 = scmp.eq.s32.totalorder %s15, 7
    %p50 = por %p48, %p49
    %p52 = scmp.ne.s32.totalorder %s35, %s51
    %p53 = scmp.eq.s32.totalorder %s15, 0
    %p54 = por %p52, %p53
    %s56 = sadd.s32 %s55, 1
    %p59 = scmp.eq.s32.totalorder %s9, 7
    %p60 = scmp.ne.s32.totalorder %s55, %s57
    %p61 = scmp.eq.s32.totalorder %s9, 0
    %p62 = por %p60, %p61
    %p63 = scmp.ne.s32.totalorder %s55, %s57
    %p64 = scmp.eq.s32.totalorder %s14, 7
    %p65 = por %p63, %p64
    %p66 = scmp.ne.s32.totalorder %s57, %s58
    %p67 = scmp.eq.s32.totalorder %s14, 0
    %p68 = por %p66, %p67
    %p69 = scmp.ne.s32.totalorder %s57, %s58
    %p70 = scmp.eq.s32.totalorder %s15, 7
    %p71 = por %p69, %p70
    %p73 = scmp.ne.s32.totalorder %s58, %s72
    %p74 = scmp.eq.s32.totalorder %s15, 0
    %p75 = por %p73, %p74
    %s77 = sadd.s32 %s76, 1
    %p80 = scmp.eq.s32.totalorder %s9, 7
    %p81 = scmp.ne.s32.totalorder %s76, %s78
    %p82 = scmp.eq.s32.totalorder %s9, 0
    %p83 = por %p81, %p82
    %p84 = scmp.ne.s32.totalorder %s76, %s78
    %p85 = scmp.eq.s32.totalorder %s14, 7
    %p86 = por %p84, %p85
    %p87 = scmp.ne.s32.totalorder %s78, %s79
    %p88 = scmp.eq.s32.totalorder %s14, 0
    %p89 = por %p87, %p88
    %p90 = scmp.ne.s32.totalorder %s78, %s79
    %p91 = scmp.eq.s32.totalorder %s15, 7
    %p92 = por %p90, %p91
    %p94 = scmp.ne.s32.totalorder %s79, %s93
    %p95 = scmp.eq.s32.totalorder %s15, 0
    %p96 = por %p94, %p95
    %s97 = ssub.s32 %s16, %s28
    %s98 = ssub.s32 %s17, %s24
    %s99 = sor.u32 %s97, %s98
    %p100 = scmp.eq.s32.totalorder %s99, 0
    %s102 = sadd.s32 %s101, 1
    %s103 = scalar_select %p100, %s101, %s102
    %p106 = pneg %p100
    %p107 = scmp.eq.s32.totalorder %s9, 7
    %p108 = por %p106, %p107
    %p109 = scmp.ne.s32.totalorder %s101, %s104
    %p110 = scmp.eq.s32.totalorder %s9, 0
    %p111 = por %p109, %p110
    %p112 = scmp.ne.s32.totalorder %s101, %s104
    %p113 = scmp.eq.s32.totalorder %s14, 7
    %p114 = por %p112, %p113
    %p115 = scmp.ne.s32.totalorder %s104, %s105
    %p116 = scmp.eq.s32.totalorder %s14, 0
    %p117 = por %p115, %p116
    %p118 = scmp.ne.s32.totalorder %s104, %s105
    %p119 = scmp.eq.s32.totalorder %s15, 7
    %p120 = por %p118, %p119
    %p122 = scmp.ne.s32.totalorder %s105, %s121
    %p123 = scmp.eq.s32.totalorder %s15, 0
    %p124 = por %p122, %p123
    %p125 = scmp.le.s32.totalorder 1, %s9
    %p126 = scmp.lt.s32.totalorder %s9, 9
    %p127 = pnand %p125, %p126
    %p128 = pneg %p127
    // Predicated region
    $region9: #{bottleneck_forward.5} parent=5 // pred_check
      _
    $region10: #{bottleneck_forward.5} parent=5 // pred_check_branch
      %130 = sbr.rel (%p127) target = $region12
    $region11: #{bottleneck_forward.5} parent=5 // pred_region
      %s131 = ssub.s32 %s9, 1
      // Predicated region
      $region13: #{bottleneck_forward.5} parent=11 // pred_check
        %p132 = pneg %p68
      $region14: #{bottleneck_forward.5} parent=11 // pred_check_branch
        %134 = sbr.rel (%p132) target = $region16
      $region15: #{bottleneck_forward.5} parent=11 // pred_region
        _
      $region16: #{bottleneck_forward.5} parent=11 // pred_fallthru
        _
      // Predicated region
      $region17: #{bottleneck_forward.5} parent=11 // pred_check
        %p135 = pneg %p89
      $region18: #{bottleneck_forward.5} parent=11 // pred_check_branch
        %137 = sbr.rel (%p135) target = $region20
      $region19: #{bottleneck_forward.5} parent=11 // pred_region
        _
      $region20: #{bottleneck_forward.5} parent=11 // pred_fallthru
        _
    $region12: #{bottleneck_forward.5} parent=5 // pred_fallthru
      _
    %p138 = scmp.lt.s32.totalorder %s9, 8
    // Predicated region
    $region21: #{bottleneck_forward.5} parent=5 // pred_check
      %p139 = pneg %p138
    $region22: #{bottleneck_forward.5} parent=5 // pred_check_branch
      %141 = sbr.rel (%p139) target = $region24
    $region23: #{bottleneck_forward.5} parent=5 // pred_region
      // Predicated region
      $region25: #{bottleneck_forward.5} parent=23 // pred_check
        %p142 = pneg %p41
      $region26: #{bottleneck_forward.5} parent=23 // pred_check_branch
        %144 = sbr.rel (%p142) target = $region28
      $region27: #{bottleneck_forward.5} parent=23 // pred_region
        %p145 = scmp.lt.s32.totalorder %s16, 1
        %s146 = scalar_select %p145, %s16, 1
        %s147 = smul.addr %s146, 108
        %s148 = smul.addr %s147, 4
        %s149 = scalar_lea.vmem %s0, %s148
      $region28: #{bottleneck_forward.5} parent=23 // pred_fallthru
        _
    $region24: #{bottleneck_forward.5} parent=5 // pred_fallthru
      _
    %p150 = scmp.le.s32.totalorder 1, %s9
    %p151 = scmp.lt.s32.totalorder %s9, 9
    %p152 = pnand %p150, %p151
    %p153 = pneg %p152
    // Predicated region
    $region29: #{bottleneck_forward.5} parent=5 // pred_check
      _
    $region30: #{bottleneck_forward.5} parent=5 // pred_check_branch
      %155 = sbr.rel (%p152) target = $region32
    $region31: #{bottleneck_forward.5} parent=5 // pred_region
      %s156 = ssub.s32 %s9, 1
      %p157 = scmp.lt.s32.totalorder %s18, 1
      %s158 = scalar_select %p157, %s18, 1
      %s159 = smul.addr %s158, 108
      %s160 = smul.addr %s159, 4
      %s161 = scalar_lea.vmem %s0, %s160
      %p162 = pneg %p47
      %p163 = pneg %p44
      %p164 = pneg %p68
      %p165 = pneg %p65
      %p166 = pneg %p89
      %p167 = pneg %p86
      %p168 = pneg %p117
      %p169 = pneg %p114
      %s170 = smul.u32 2, %s19
      %p171 = scmp.lt.s32.totalorder %s18, 1
      %s172 = scalar_select %p171, %s18, 1
      %p173 = scmp.lt.s32.totalorder %s170, 7
      %s174 = scalar_select %p173, %s170, 7
      %s175 = smul.addr %s172, 8
      %s176 = sadd.s32 %s174, %s175
      %s177 = smul.addr %s176, 4
      %s178 = scalar_lea.vmem %s3, %s177
      %p179 = scmp.lt.s32.totalorder %s18, 1
      %s180 = scalar_select %p179, %s18, 1
      %s181 = smul.addr %s180, 108
      %s182 = smul.addr %s181, 4
      %s183 = scalar_lea.vmem %s0, %s182
      %s184 = smul.u32 2, %s19
      %p185 = scmp.lt.s32.totalorder %s18, 1
      %s186 = scalar_select %p185, %s18, 1
      %p187 = scmp.lt.s32.totalorder %s184, 7
      %s188 = scalar_select %p187, %s184, 7
      %s189 = smul.addr %s186, 8
      %s190 = sadd.s32 %s188, %s189
      %s191 = smul.addr %s190, 4
      %s192 = scalar_lea.vmem %s3, %s191
      %s193 = smul.u32 2, %s19
      %s195 = smul.u32 %s19, 2
      %s196 = smul.u32 %s195, 3
      %s197 = smul.addr %s196, 4
      %s198 = scalar_lea.vmem %s183, %s197
      %v199 = vld [vmem:[%s198] sm:$0xf]
      %v200 = vld [vmem:[%s198 + $0x4] sm:$0xf]
      %v201 = vld [vmem:[%s198 + $0xc] sm:$0xf]
      %v202 = vld [vmem:[%s198 + $0x10] sm:$0xf]
      %v203 = vld [vmem:[%s1] sm:$0xf]
      %s204 = sadd.s32 %s196, 27
      %s205 = smul.addr %s204, 4
      %s206 = scalar_lea.vmem %s183, %s205
      %v207 = vld [vmem:[%s206] sm:$0xf]
      %v208 = vld [vmem:[%s206 + $0x4] sm:$0xf]
      %v209 = vld [vmem:[%s206 + $0xc] sm:$0xf]
      %v210 = vld [vmem:[%s206 + $0x10] sm:$0xf]
      %s211 = scalar_lea.vmem %s1, 4
      %v212 = vld [vmem:[%s211] sm:$0xf]
      %v217 = vunpack.c.l.b16 %v207
      %v218 = vunpack.c.l.b16 %v208
      %v219 = vunpack.c.l.b16 %v209
      %v220 = vunpack.c.l.b16 %v210
      %v221 = vpack.c.b16 %v218, %v217
      %v222 = vpack.c.b16 %v220, %v219
      %vm223 = vcmask 64512
      %v225 = vsel %vm223, %v221, 0
      %v228 = vsel %vm223, %v222, 0
      %vm230 = vcmask 1043456
      %v232 = vsel %vm230, %v212, 0
      %234 = vmatpush.bf16.msra.mxu0 0
      %235 = vmatpush.bf16.msra.mxu0 0
      %236 = vmatpush.bf16.msra.mxu0 0
      %237 = vmatpush.bf16.msra.mxu0 0
      %238 = vmatpush.bf16.msra.mxu0 0
      %239 = vmatpush.bf16.msra.mxu0 0
      %240 = vmatpush.bf16.msra.mxu0 0
      %241 = vmatpush.bf16.msra.mxu0 %v232
      %242 = vmatmul.bf16.gmra.mxu0 %v225
      %v243 = vpop.f32.mrf.mxu0
      %v244 = vadd.f32 0.0, %v243
      %v245 = vpop.f32.mrf.mxu0
      %246 = vmatmul.bf16.gmra.mxu0 %v228
      %v247 = vpop.f32.mrf.mxu0
      %v248 = vadd.f32 0.0, %v247
      %v249 = vpop.f32.mrf.mxu0
      %250 = vdwg.mxu0
      %v255 = vunpack.c.l.b16 %v199
      %v256 = vunpack.c.l.b16 %v200
      %v257 = vunpack.c.l.b16 %v201
      %v258 = vunpack.c.l.b16 %v202
      %v259 = vpack.c.b16 %v256, %v255
      %v260 = vpack.c.b16 %v258, %v257
      %v262 = vsel %vm223, %v259, 0
      %v265 = vsel %vm223, %v260, 0
      %v268 = vsel %vm230, %v203, 0
      %270 = vmatpush.bf16.msra.mxu0 0
      %271 = vmatpush.bf16.msra.mxu0 0
      %272 = vmatpush.bf16.msra.mxu0 0
      %273 = vmatpush.bf16.msra.mxu0 0
      %274 = vmatpush.bf16.msra.mxu0 0
      %275 = vmatpush.bf16.msra.mxu0 0
      %276 = vmatpush.bf16.msra.mxu0 0
      %277 = vmatpush.bf16.msra.mxu0 %v268
      %278 = vmatmul.bf16.gmra.mxu0 %v262
      %v279 = vpop.f32.mrf.mxu0
      %v280 = vadd.f32 %v244, %v279
      %v281 = vpop.f32.mrf.mxu0
      %282 = vmatmul.bf16.gmra.mxu0 %v265
      %v283 = vpop.f32.mrf.mxu0
      %v284 = vadd.f32 %v248, %v283
      %v285 = vpop.f32.mrf.mxu0
      %286 = vdwg.mxu0
      %v287 = vld [vmem:[%s198] sm:$0xf]
      %v288 = vld [vmem:[%s198 + $0x4] sm:$0xf]
      %v289 = vld [vmem:[%s198 + $0x8] sm:$0x1]
      %v290 = vld [vmem:[%s198 + $0xc] sm:$0xf]
      %v291 = vld [vmem:[%s198 + $0x10] sm:$0xf]
      %v292 = vld [vmem:[%s198 + $0x14] sm:$0x1]
      %vm293 = vsmask.f32 3328
      %vm294 = vsmask.f32 7440
      %vm295 = vmor %vm293, %vm294
      %v297 = vshrl.u32 %v287, 16
      %v299 = vrot.slane %v297, 4
      %v300 = vshll.u32 %v287, 16
      %v302 = vrot.slane %v300, 5
      %v303 = vor.u32 %v299, %v302
      %v304 = vrot.slane %v303, 4
      %v306 = vshll.u32 %v288, 16
      %v308 = vrot.slane %v306, 5
      %v309 = vsel %vm295, %v304, %v308
      %v310 = vshrl.u32 %v288, 16
      %v312 = vrot.slane %v310, 4
      %v313 = vor.u32 %v312, %v308
      %v314 = vrot.slane %v313, 4
      %v316 = vshll.u32 %v289, 16
      %v318 = vrot.slane %v316, 5
      %v319 = vsel %vm295, %v314, %v318
      %v321 = vshrl.u32 %v290, 16
      %v323 = vrot.slane %v321, 4
      %v324 = vshll.u32 %v290, 16
      %v326 = vrot.slane %v324, 5
      %v327 = vor.u32 %v323, %v326
      %v328 = vrot.slane %v327, 4
      %v330 = vshll.u32 %v291, 16
      %v332 = vrot.slane %v330, 5
      %v333 = vsel %vm295, %v328, %v332
      %v334 = vshrl.u32 %v291, 16
      %v336 = vrot.slane %v334, 4
      %v337 = vor.u32 %v336, %v332
      %v338 = vrot.slane %v337, 4
      %v340 = vshll.u32 %v292, 16
      %v342 = vrot.slane %v340, 5
      %v343 = vsel %vm295, %v338, %v342
      %s344 = scalar_lea.vmem %s1, 8
      %v345 = vld [vmem:[%s344] sm:$0xf]
      %v346 = vunpack.c.l.b16 %v309
      %v347 = vunpack.c.l.b16 %v319
      %v348 = vunpack.c.l.b16 %v333
      %v349 = vunpack.c.l.b16 %v343
      %v350 = vpack.c.b16 %v347, %v346
      %v351 = vpack.c.b16 %v349, %v348
      %v353 = vsel %vm223, %v350, 0
      %v356 = vsel %vm223, %v351, 0
      %v359 = vsel %vm230, %v345, 0
      %361 = vmatpush.bf16.msra.mxu0 0
      %362 = vmatpush.bf16.msra.mxu0 0
      %363 = vmatpush.bf16.msra.mxu0 0
      %364 = vmatpush.bf16.msra.mxu0 0
      %365 = vmatpush.bf16.msra.mxu0 0
      %366 = vmatpush.bf16.msra.mxu0 0
      %367 = vmatpush.bf16.msra.mxu0 0
      %368 = vmatpush.bf16.msra.mxu0 %v359
      %369 = vmatmul.bf16.gmra.mxu0 %v353
      %v370 = vpop.f32.mrf.mxu0
      %v371 = vadd.f32 0.0, %v370
      %v372 = vpop.f32.mrf.mxu0
      %373 = vmatmul.bf16.gmra.mxu0 %v356
      %v374 = vpop.f32.mrf.mxu0
      %v375 = vadd.f32 0.0, %v374
      %v376 = vpop.f32.mrf.mxu0
      %377 = vdwg.mxu0
      %v378 = vadd.f32 %v280, %v371
      %v379 = vadd.f32 %v284, %v375
      %s380 = sadd.s32 %s196, 54
      %s381 = smul.addr %s380, 4
      %s382 = scalar_lea.vmem %s183, %s381
      %v383 = vld [vmem:[%s382] sm:$0xf]
      %v384 = vld [vmem:[%s382 + $0x4] sm:$0xf]
      %v385 = vld [vmem:[%s382 + $0xc] sm:$0xf]
      %v386 = vld [vmem:[%s382 + $0x10] sm:$0xf]
      %s387 = scalar_lea.vmem %s1, 12
      %v388 = vld [vmem:[%s387] sm:$0xf]
      %v393 = vunpack.c.l.b16 %v383
      %v394 = vunpack.c.l.b16 %v384
      %v395 = vunpack.c.l.b16 %v385
      %v396 = vunpack.c.l.b16 %v386
      %v397 = vpack.c.b16 %v394, %v393
      %v398 = vpack.c.b16 %v396, %v395
      %v400 = vsel %vm223, %v397, 0
      %v403 = vsel %vm223, %v398, 0
      %v406 = vsel %vm230, %v388, 0
      %408 = vmatpush.bf16.msra.mxu0 0
      %409 = vmatpush.bf16.msra.mxu0 0
      %410 = vmatpush.bf16.msra.mxu0 0
      %411 = vmatpush.bf16.msra.mxu0 0
      %412 = vmatpush.bf16.msra.mxu0 0
      %413 = vmatpush.bf16.msra.mxu0 0
      %414 = vmatpush.bf16.msra.mxu0 0
      %415 = vmatpush.bf16.msra.mxu0 %v406
      %416 = vmatmul.bf16.gmra.mxu0 %v400
      %v417 = vpop.f32.mrf.mxu0
      %v418 = vadd.f32 0.0, %v417
      %v419 = vpop.f32.mrf.mxu0
      %420 = vmatmul.bf16.gmra.mxu0 %v403
      %v421 = vpop.f32.mrf.mxu0
      %v422 = vadd.f32 0.0, %v421
      %v423 = vpop.f32.mrf.mxu0
      %424 = vdwg.mxu0
      %v425 = vadd.f32 %v378, %v418
      %v426 = vadd.f32 %v379, %v422
      %s427 = sadd.s32 %s196, 81
      %s428 = smul.addr %s427, 4
      %s429 = scalar_lea.vmem %s183, %s428
      %v430 = vld [vmem:[%s429] sm:$0xf]
      %v431 = vld [vmem:[%s429 + $0x4] sm:$0xf]
      %v432 = vld [vmem:[%s429 + $0xc] sm:$0xf]
      %v433 = vld [vmem:[%s429 + $0x10] sm:$0xf]
      %s434 = scalar_lea.vmem %s1, 16
      %v435 = vld [vmem:[%s434] sm:$0xf]
      %v440 = vunpack.c.l.b16 %v430
      %v441 = vunpack.c.l.b16 %v431
      %v442 = vunpack.c.l.b16 %v432
      %v443 = vunpack.c.l.b16 %v433
      %v444 = vpack.c.b16 %v441, %v440
      %v445 = vpack.c.b16 %v443, %v442
      %v447 = vsel %vm223, %v444, 0
      %v450 = vsel %vm223, %v445, 0
      %v453 = vsel %vm230, %v435, 0
      %455 = vmatpush.bf16.msra.mxu0 0
      %456 = vmatpush.bf16.msra.mxu0 0
      %457 = vmatpush.bf16.msra.mxu0 0
      %458 = vmatpush.bf16.msra.mxu0 0
      %459 = vmatpush.bf16.msra.mxu0 0
      %460 = vmatpush.bf16.msra.mxu0 0
      %461 = vmatpush.bf16.msra.mxu0 0
      %462 = vmatpush.bf16.msra.mxu0 %v453
      %463 = vmatmul.bf16.gmra.mxu0 %v447
      %v464 = vpop.f32.mrf.mxu0
      %v465 = vadd.f32 0.0, %v464
      %v466 = vpop.f32.mrf.mxu0
      %467 = vmatmul.bf16.gmra.mxu0 %v450
      %v468 = vpop.f32.mrf.mxu0
      %v469 = vadd.f32 0.0, %v468
      %v470 = vpop.f32.mrf.mxu0
      %471 = vdwg.mxu0
      %v472 = vadd.f32 %v425, %v465
      %v473 = vadd.f32 %v426, %v469
      %v474 = vld [vmem:[%s382] sm:$0xf]
      %v475 = vld [vmem:[%s382 + $0x4] sm:$0xf]
      %v476 = vld [vmem:[%s382 + $0x8] sm:$0x1]
      %v477 = vld [vmem:[%s382 + $0xc] sm:$0xf]
      %v478 = vld [vmem:[%s382 + $0x10] sm:$0xf]
      %v479 = vld [vmem:[%s382 + $0x14] sm:$0x1]
      %v481 = vshrl.u32 %v474, 16
      %v483 = vrot.slane %v481, 4
      %v484 = vshll.u32 %v474, 16
      %v486 = vrot.slane %v484, 5
      %v487 = vor.u32 %v483, %v486
      %v488 = vrot.slane %v487, 4
      %v490 = vshll.u32 %v475, 16
      %v492 = vrot.slane %v490, 5
      %v493 = vsel %vm295, %v488, %v492
      %v494 = vshrl.u32 %v475, 16
      %v496 = vrot.slane %v494, 4
      %v497 = vor.u32 %v496, %v492
      %v498 = vrot.slane %v497, 4
      %v500 = vshll.u32 %v476, 16
      %v502 = vrot.slane %v500, 5
      %v503 = vsel %vm295, %v498, %v502
      %v505 = vshrl.u32 %v477, 16
      %v507 = vrot.slane %v505, 4
      %v508 = vshll.u32 %v477, 16
      %v510 = vrot.slane %v508, 5
      %v511 = vor.u32 %v507, %v510
      %v512 = vrot.slane %v511, 4
      %v514 = vshll.u32 %v478, 16
      %v516 = vrot.slane %v514, 5
      %v517 = vsel %vm295, %v512, %v516
      %v518 = vshrl.u32 %v478, 16
      %v520 = vrot.slane %v518, 4
      %v521 = vor.u32 %v520, %v516
      %v522 = vrot.slane %v521, 4
      %v524 = vshll.u32 %v479, 16
      %v526 = vrot.slane %v524, 5
      %v527 = vsel %vm295, %v522, %v526
      %s528 = scalar_lea.vmem %s1, 20
      %v529 = vld [vmem:[%s528] sm:$0xf]
      %v530 = vunpack.c.l.b16 %v493
      %v531 = vunpack.c.l.b16 %v503
      %v532 = vunpack.c.l.b16 %v517
      %v533 = vunpack.c.l.b16 %v527
      %v534 = vpack.c.b16 %v531, %v530
      %v535 = vpack.c.b16 %v533, %v532
      %v537 = vsel %vm223, %v534, 0
      %v540 = vsel %vm223, %v535, 0
      %v543 = vsel %vm230, %v529, 0
      %545 = vmatpush.bf16.msra.mxu0 0
      %546 = vmatpush.bf16.msra.mxu0 0
      %547 = vmatpush.bf16.msra.mxu0 0
      %548 = vmatpush.bf16.msra.mxu0 0
      %549 = vmatpush.bf16.msra.mxu0 0
      %550 = vmatpush.bf16.msra.mxu0 0
      %551 = vmatpush.bf16.msra.mxu0 0
      %552 = vmatpush.bf16.msra.mxu0 %v543
      %553 = vmatmul.bf16.gmra.mxu0 %v537
      %v554 = vpop.f32.mrf.mxu0
      %v555 = vadd.f32 0.0, %v554
      %v556 = vpop.f32.mrf.mxu0
      %557 = vmatmul.bf16.gmra.mxu0 %v540
      %v558 = vpop.f32.mrf.mxu0
      %v559 = vadd.f32 0.0, %v558
      %v560 = vpop.f32.mrf.mxu0
      %561 = vdwg.mxu0
      %v562 = vadd.f32 %v472, %v555
      %v563 = vadd.f32 %v473, %v559
      %s564 = sadd.s32 %s195, 1
      %s565 = smul.u32 %s564, 3
      %s566 = smul.addr %s565, 4
      %s567 = scalar_lea.vmem %s183, %s566
      %v568 = vld [vmem:[%s567] sm:$0xf]
      %v569 = vld [vmem:[%s567 + $0x4] sm:$0xf]
      %v570 = vld [vmem:[%s567 + $0xc] sm:$0xf]
      %v571 = vld [vmem:[%s567 + $0x10] sm:$0xf]
      %s572 = scalar_lea.vmem %s1, 24
      %v573 = vld [vmem:[%s572] sm:$0xf]
      %v578 = vunpack.c.l.b16 %v568
      %v579 = vunpack.c.l.b16 %v569
      %v580 = vunpack.c.l.b16 %v570
      %v581 = vunpack.c.l.b16 %v571
      %v582 = vpack.c.b16 %v579, %v578
      %v583 = vpack.c.b16 %v581, %v580
      %v585 = vsel %vm223, %v582, 0
      %v588 = vsel %vm223, %v583, 0
      %v591 = vsel %vm230, %v573, 0
      %593 = vmatpush.bf16.msra.mxu0 0
      %594 = vmatpush.bf16.msra.mxu0 0
      %595 = vmatpush.bf16.msra.mxu0 0
      %596 = vmatpush.bf16.msra.mxu0 0
      %597 = vmatpush.bf16.msra.mxu0 0
      %598 = vmatpush.bf16.msra.mxu0 0
      %599 = vmatpush.bf16.msra.mxu0 0
      %600 = vmatpush.bf16.msra.mxu0 %v591
      %601 = vmatmul.bf16.gmra.mxu0 %v585
      %v602 = vpop.f32.mrf.mxu0
      %v603 = vadd.f32 0.0, %v602
      %v604 = vpop.f32.mrf.mxu0
      %605 = vmatmul.bf16.gmra.mxu0 %v588
      %v606 = vpop.f32.mrf.mxu0
      %v607 = vadd.f32 0.0, %v606
      %v608 = vpop.f32.mrf.mxu0
      %609 = vdwg.mxu0
      %v610 = vadd.f32 %v562, %v603
      %v611 = vadd.f32 %v563, %v607
      %s612 = sadd.s32 %s565, 27
      %s613 = smul.addr %s612, 4
      %s614 = scalar_lea.vmem %s183, %s613
      %v615 = vld [vmem:[%s614] sm:$0xf]
      %v616 = vld [vmem:[%s614 + $0x4] sm:$0xf]
      %v617 = vld [vmem:[%s614 + $0xc] sm:$0xf]
      %v618 = vld [vmem:[%s614 + $0x10] sm:$0xf]
      %s619 = scalar_lea.vmem %s1, 28
      %v620 = vld [vmem:[%s619] sm:$0xf]
      %v625 = vunpack.c.l.b16 %v615
      %v626 = vunpack.c.l.b16 %v616
      %v627 = vunpack.c.l.b16 %v617
      %v628 = vunpack.c.l.b16 %v618
      %v629 = vpack.c.b16 %v626, %v625
      %v630 = vpack.c.b16 %v628, %v627
      %v632 = vsel %vm223, %v629, 0
      %v635 = vsel %vm223, %v630, 0
      %v638 = vsel %vm230, %v620, 0
      %640 = vmatpush.bf16.msra.mxu0 0
      %641 = vmatpush.bf16.msra.mxu0 0
      %642 = vmatpush.bf16.msra.mxu0 0
      %643 = vmatpush.bf16.msra.mxu0 0
      %644 = vmatpush.bf16.msra.mxu0 0
      %645 = vmatpush.bf16.msra.mxu0 0
      %646 = vmatpush.bf16.msra.mxu0 0
      %647 = vmatpush.bf16.msra.mxu0 %v638
      %648 = vmatmul.bf16.gmra.mxu0 %v632
      %v649 = vpop.f32.mrf.mxu0
      %v650 = vadd.f32 0.0, %v649
      %v651 = vpop.f32.mrf.mxu0
      %652 = vmatmul.bf16.gmra.mxu0 %v635
      %v653 = vpop.f32.mrf.mxu0
      %v654 = vadd.f32 0.0, %v653
      %v655 = vpop.f32.mrf.mxu0
      %656 = vdwg.mxu0
      %v657 = vadd.f32 %v610, %v650
      %v658 = vadd.f32 %v611, %v654
      %v659 = vld [vmem:[%s567] sm:$0xf]
      %v660 = vld [vmem:[%s567 + $0x4] sm:$0xf]
      %v661 = vld [vmem:[%s567 + $0x8] sm:$0x1]
      %v662 = vld [vmem:[%s567 + $0xc] sm:$0xf]
      %v663 = vld [vmem:[%s567 + $0x10] sm:$0xf]
      %v664 = vld [vmem:[%s567 + $0x14] sm:$0x1]
      %v666 = vshrl.u32 %v659, 16
      %v668 = vrot.slane %v666, 4
      %v669 = vshll.u32 %v659, 16
      %v671 = vrot.slane %v669, 5
      %v672 = vor.u32 %v668, %v671
      %v673 = vrot.slane %v672, 4
      %v675 = vshll.u32 %v660, 16
      %v677 = vrot.slane %v675, 5
      %v678 = vsel %vm295, %v673, %v677
      %v679 = vshrl.u32 %v660, 16
      %v681 = vrot.slane %v679, 4
      %v682 = vor.u32 %v681, %v677
      %v683 = vrot.slane %v682, 4
      %v685 = vshll.u32 %v661, 16
      %v687 = vrot.slane %v685, 5
      %v688 = vsel %vm295, %v683, %v687
      %v690 = vshrl.u32 %v662, 16
      %v692 = vrot.slane %v690, 4
      %v693 = vshll.u32 %v662, 16
      %v695 = vrot.slane %v693, 5
      %v696 = vor.u32 %v692, %v695
      %v697 = vrot.slane %v696, 4
      %v699 = vshll.u32 %v663, 16
      %v701 = vrot.slane %v699, 5
      %v702 = vsel %vm295, %v697, %v701
      %v703 = vshrl.u32 %v663, 16
      %v705 = vrot.slane %v703, 4
      %v706 = vor.u32 %v705, %v701
      %v707 = vrot.slane %v706, 4
      %v709 = vshll.u32 %v664, 16
      %v711 = vrot.slane %v709, 5
      %v712 = vsel %vm295, %v707, %v711
      %s713 = scalar_lea.vmem %s1, 32
      %v714 = vld [vmem:[%s713] sm:$0xf]
      %v715 = vunpack.c.l.b16 %v678
      %v716 = vunpack.c.l.b16 %v688
      %v717 = vunpack.c.l.b16 %v702
      %v718 = vunpack.c.l.b16 %v712
      %v719 = vpack.c.b16 %v716, %v715
      %v720 = vpack.c.b16 %v718, %v717
      %v722 = vsel %vm223, %v719, 0
      %v725 = vsel %vm223, %v720, 0
      %v728 = vsel %vm230, %v714, 0
      %730 = vmatpush.bf16.msra.mxu0 0
      %731 = vmatpush.bf16.msra.mxu0 0
      %732 = vmatpush.bf16.msra.mxu0 0
      %733 = vmatpush.bf16.msra.mxu0 0
      %734 = vmatpush.bf16.msra.mxu0 0
      %735 = vmatpush.bf16.msra.mxu0 0
      %736 = vmatpush.bf16.msra.mxu0 0
      %737 = vmatpush.bf16.msra.mxu0 %v728
      %738 = vmatmul.bf16.gmra.mxu0 %v722
      %v739 = vpop.f32.mrf.mxu0
      %v740 = vadd.f32 0.0, %v739
      %v741 = vpop.f32.mrf.mxu0
      %742 = vmatmul.bf16.gmra.mxu0 %v725
      %v743 = vpop.f32.mrf.mxu0
      %v744 = vadd.f32 0.0, %v743
      %v745 = vpop.f32.mrf.mxu0
      %746 = vdwg.mxu0
      %v747 = vadd.f32 %v657, %v740
      %v748 = vadd.f32 %v658, %v744
      %v749 = vld [vmem:[%s2] sm:$0x1]
      %v751 = vperm.slane %v749, 0
      %v753 = vadd.f32 %v747, %v751
      %v754 = vadd.f32 %v748, %v751
      %v755 = vmax.f32 %v753, 0.0
      %v756 = vmax.f32 %v754, 0.0
      %v757 = vpack.c.bf16 %v755, %v755
      %v758 = vpack.c.bf16 %v756, %v756
      %vm759 = vcmask 60416
      %760 = vst.msk [vmem:[%s192] sm:$0xf] %vm759, %v757
      %761 = vst.msk [vmem:[%s192 + $0x4] sm:$0xf] %vm759, %v758
      %s762 = smul.u32 2, %s19
      %p763 = scmp.lt.s32.totalorder %s18, 1
      %s764 = scalar_select %p763, %s18, 1
      %p765 = scmp.lt.s32.totalorder %s762, 7
      %s766 = scalar_select %p765, %s762, 7
      %s767 = smul.addr %s764, 8
      %s768 = sadd.s32 %s766, %s767
      %s769 = smul.addr %s768, 4
      %s770 = scalar_lea.vmem %s3, %s769
      // Predicated region
      $region33: #{bottleneck_forward.5} parent=31 // pred_check
        %p771 = pneg %p114
      $region34: #{bottleneck_forward.5} parent=31 // pred_check_branch
        %773 = sbr.rel (%p771) target = $region36
      $region35: #{bottleneck_forward.5} parent=31 // pred_region
        %s774 = smul.u32 2, %s19
      $region36: #{bottleneck_forward.5} parent=31 // pred_fallthru
        _
    $region32: #{bottleneck_forward.5} parent=5 // pred_fallthru
      _
    %p775 = scmp.le.s32.totalorder 2, %s9
    // Predicated region
    $region37: #{bottleneck_forward.5} parent=5 // pred_check
      %p776 = pneg %p775
    $region38: #{bottleneck_forward.5} parent=5 // pred_check_branch
      %778 = sbr.rel (%p776) target = $region40
    $region39: #{bottleneck_forward.5} parent=5 // pred_region
      %s779 = ssub.s32 %s9, 2
      // Predicated region
      $region41: #{bottleneck_forward.5} parent=39 // pred_check
        %p780 = pneg %p120
      $region42: #{bottleneck_forward.5} parent=39 // pred_check_branch
        %782 = sbr.rel (%p780) target = $region44
      $region43: #{bottleneck_forward.5} parent=39 // pred_region
        %s783 = smul.u32 2, %s21
        %p784 = scmp.lt.s32.totalorder %s20, 1
        %s785 = scalar_select %p784, %s20, 1
        %p786 = scmp.lt.s32.totalorder %s783, 7
        %s787 = scalar_select %p786, %s783, 7
        %s788 = smul.addr %s785, 8
        %s789 = sadd.s32 %s787, %s788
        %s790 = smul.addr %s789, 4
        %s791 = scalar_lea.vmem %s3, %s790
      $region44: #{bottleneck_forward.5} parent=39 // pred_fallthru
        _
    $region40: #{bottleneck_forward.5} parent=5 // pred_fallthru
      _
  $region6: #{bottleneck_forward.5} parent=0 // loop_footer
    %s13 = sadd.s32 1, %s9
  $region7: #{bottleneck_forward.5} parent=0 // loop_footer_branch
    %8 = sbr.rel target = $region3
  $region8: #{bottleneck_forward.5} parent=0 // loop_exit
    _

// kernel: bottleneck_forward.7
$region0: #{bottleneck_forward.7}
  #allocation0 [shape = 'u32[]', space=smem, size = 0x4, offset = 0x4, fixed_abs, tag = 'smem constant byte address 0x4 - core index']
  #allocation1 [shape = 'u32[72,128]{1,0:T(1,128)}', space=vmem, size = 0x9000, scoped, tag = 'internal scratch']
  %s0 = inlined_call_operand.vmem [shape: bf16[128,8], index: 0, kind: input, shape index: {}]
  %s1 = inlined_call_operand.vmem [shape: bf16[8,32], index: 1, kind: input, shape index: {}]
  %s2 = inlined_call_operand.vmem [shape: f32[1,32], index: 2, kind: input, shape index: {}]
  %s3 = inlined_call_operand.vmem [shape: bf16[128,32], index: 3, kind: input, shape index: {}]
  %s4 = inlined_call_operand.vmem [shape: bf16[128,32], index: 4, kind: output, shape index: {}]
  %s5 = sld [smem:[#allocation0]]
  $region49: #{bottleneck_forward.7} parent=0
    _
  %s7 = ssub.s32 1, %s5
  %s8 = scalar_select 0, %s7, %s5
  loop: start=0, step=1, limit=10
  $region2: #{bottleneck_forward.7} parent=0 // loop_pre_header
    _
  $region3: #{bottleneck_forward.7} parent=0 // loop_header
    %s10 = sphi 0, %s14
    %p11 = scmp.ge.s32.totalorder %s10, 10
    %s17 = sphi 0, %s29
    %s18 = sphi 0, %s25
    %s19 = sphi 0, %s17
    %s20 = sphi 0, %s18
    %s21 = sphi 0, %s19
    %s22 = sphi 0, %s20
    %s32 = sphi 0, %s34
    %s35 = sphi 0, %s32
    %s36 = sphi 0, %s35
    %s52 = sphi 0, %s36
    %s58 = sphi 0, %s60
    %s61 = sphi 0, %s58
    %s62 = sphi 0, %s61
    %s78 = sphi 0, %s62
    %s84 = sphi 0, %s86
    %s87 = sphi 0, %s84
    %s88 = sphi 0, %s87
    %s104 = sphi 0, %s88
    %s112 = sphi 0, %s114
    %s115 = sphi 0, %s112
    %s116 = sphi 0, %s115
    %s132 = sphi 0, %s116
    %s140 = sphi 0, %s142
    %s143 = sphi 0, %s140
    %s144 = sphi 0, %s143
    %s160 = sphi 0, %s144
  $region4: #{bottleneck_forward.7} parent=0 // loop_header_branch
    %13 = sbr.rel (%p11) target = $region8
  $region5: #{bottleneck_forward.7} parent=0 // loop_body
    %s15 = ssub.s32 %s10, 1
    %s16 = ssub.s32 %s10, 2
    %s23 = sadd.s32 1, %s18
    %p24 = scmp.ge.s32.totalorder %s23, 8
    %s25 = scalar_select %p24, 0, %s23
    %s26 = sadd.s32 1, %s17
    %s27 = scalar_select %p24, %s26, %s17
    %p28 = scmp.ge.s32.totalorder %s27, 1
    %s29 = scalar_select %p28, 0, %s27
    %s30 = ssub.s32 %s18, %s25
    %p31 = scmp.eq.s32.totalorder %s30, 0
    %s33 = sadd.s32 %s32, 1
    %s34 = scalar_select %p31, %s32, %s33
    %p37 = pneg %p31
    %p38 = scmp.eq.s32.totalorder %s10, 7
    %p39 = por %p37, %p38
    %p40 = scmp.ne.s32.totalorder %s32, %s35
    %p41 = scmp.eq.s32.totalorder %s10, 0
    %p42 = por %p40, %p41
    %p43 = scmp.ne.s32.totalorder %s32, %s35
    %p44 = scmp.eq.s32.totalorder %s15, 7
    %p45 = por %p43, %p44
    %p46 = scmp.ne.s32.totalorder %s35, %s36
    %p47 = scmp.eq.s32.totalorder %s15, 0
    %p48 = por %p46, %p47
    %p49 = scmp.ne.s32.totalorder %s35, %s36
    %p50 = scmp.eq.s32.totalorder %s16, 7
    %p51 = por %p49, %p50
    %p53 = scmp.ne.s32.totalorder %s36, %s52
    %p54 = scmp.eq.s32.totalorder %s16, 0
    %p55 = por %p53, %p54
    %s56 = ssub.s32 %s17, %s29
    %p57 = scmp.eq.s32.totalorder %s56, 0
    %s59 = sadd.s32 %s58, 1
    %s60 = scalar_select %p57, %s58, %s59
    %p63 = pneg %p57
    %p64 = scmp.eq.s32.totalorder %s10, 7
    %p65 = por %p63, %p64
    %p66 = scmp.ne.s32.totalorder %s58, %s61
    %p67 = scmp.eq.s32.totalorder %s10, 0
    %p68 = por %p66, %p67
    %p69 = scmp.ne.s32.totalorder %s58, %s61
    %p70 = scmp.eq.s32.totalorder %s15, 7
    %p71 = por %p69, %p70
    %p72 = scmp.ne.s32.totalorder %s61, %s62
    %p73 = scmp.eq.s32.totalorder %s15, 0
    %p74 = por %p72, %p73
    %p75 = scmp.ne.s32.totalorder %s61, %s62
    %p76 = scmp.eq.s32.totalorder %s16, 7
    %p77 = por %p75, %p76
    %p79 = scmp.ne.s32.totalorder %s62, %s78
    %p80 = scmp.eq.s32.totalorder %s16, 0
    %p81 = por %p79, %p80
    %s82 = ssub.s32 %s17, %s29
    %p83 = scmp.eq.s32.totalorder %s82, 0
    %s85 = sadd.s32 %s84, 1
    %s86 = scalar_select %p83, %s84, %s85
    %p89 = pneg %p83
    %p90 = scmp.eq.s32.totalorder %s10, 7
    %p91 = por %p89, %p90
    %p92 = scmp.ne.s32.totalorder %s84, %s87
    %p93 = scmp.eq.s32.totalorder %s10, 0
    %p94 = por %p92, %p93
    %p95 = scmp.ne.s32.totalorder %s84, %s87
    %p96 = scmp.eq.s32.totalorder %s15, 7
    %p97 = por %p95, %p96
    %p98 = scmp.ne.s32.totalorder %s87, %s88
    %p99 = scmp.eq.s32.totalorder %s15, 0
    %p100 = por %p98, %p99
    %p101 = scmp.ne.s32.totalorder %s87, %s88
    %p102 = scmp.eq.s32.totalorder %s16, 7
    %p103 = por %p101, %p102
    %p105 = scmp.ne.s32.totalorder %s88, %s104
    %p106 = scmp.eq.s32.totalorder %s16, 0
    %p107 = por %p105, %p106
    %s108 = ssub.s32 %s18, %s25
    %s109 = ssub.s32 %s17, %s29
    %s110 = sor.u32 %s108, %s109
    %p111 = scmp.eq.s32.totalorder %s110, 0
    %s113 = sadd.s32 %s112, 1
    %s114 = scalar_select %p111, %s112, %s113
    %p117 = pneg %p111
    %p118 = scmp.eq.s32.totalorder %s10, 7
    %p119 = por %p117, %p118
    %p120 = scmp.ne.s32.totalorder %s112, %s115
    %p121 = scmp.eq.s32.totalorder %s10, 0
    %p122 = por %p120, %p121
    %p123 = scmp.ne.s32.totalorder %s112, %s115
    %p124 = scmp.eq.s32.totalorder %s15, 7
    %p125 = por %p123, %p124
    %p126 = scmp.ne.s32.totalorder %s115, %s116
    %p127 = scmp.eq.s32.totalorder %s15, 0
    %p128 = por %p126, %p127
    %p129 = scmp.ne.s32.totalorder %s115, %s116
    %p130 = scmp.eq.s32.totalorder %s16, 7
    %p131 = por %p129, %p130
    %p133 = scmp.ne.s32.totalorder %s116, %s132
    %p134 = scmp.eq.s32.totalorder %s16, 0
    %p135 = por %p133, %p134
    %s136 = ssub.s32 %s18, %s25
    %s137 = ssub.s32 %s17, %s29
    %s138 = sor.u32 %s136, %s137
    %p139 = scmp.eq.s32.totalorder %s138, 0
    %s141 = sadd.s32 %s140, 1
    %s142 = scalar_select %p139, %s140, %s141
    %p145 = pneg %p139
    %p146 = scmp.eq.s32.totalorder %s10, 7
    %p147 = por %p145, %p146
    %p148 = scmp.ne.s32.totalorder %s140, %s143
    %p149 = scmp.eq.s32.totalorder %s10, 0
    %p150 = por %p148, %p149
    %p151 = scmp.ne.s32.totalorder %s140, %s143
    %p152 = scmp.eq.s32.totalorder %s15, 7
    %p153 = por %p151, %p152
    %p154 = scmp.ne.s32.totalorder %s143, %s144
    %p155 = scmp.eq.s32.totalorder %s15, 0
    %p156 = por %p154, %p155
    %p157 = scmp.ne.s32.totalorder %s143, %s144
    %p158 = scmp.eq.s32.totalorder %s16, 7
    %p159 = por %p157, %p158
    %p161 = scmp.ne.s32.totalorder %s144, %s160
    %p162 = scmp.eq.s32.totalorder %s16, 0
    %p163 = por %p161, %p162
    %p164 = scmp.le.s32.totalorder 1, %s10
    %p165 = scmp.lt.s32.totalorder %s10, 9
    %p166 = pnand %p164, %p165
    %p167 = pneg %p166
    // Predicated region
    $region9: #{bottleneck_forward.7} parent=5 // pred_check
      _
    $region10: #{bottleneck_forward.7} parent=5 // pred_check_branch
      %169 = sbr.rel (%p166) target = $region12
    $region11: #{bottleneck_forward.7} parent=5 // pred_region
      %s170 = ssub.s32 %s10, 1
      // Predicated region
      $region13: #{bottleneck_forward.7} parent=11 // pred_check
        %p171 = pneg %p74
      $region14: #{bottleneck_forward.7} parent=11 // pred_check_branch
        %173 = sbr.rel (%p171) target = $region16
      $region15: #{bottleneck_forward.7} parent=11 // pred_region
        %p174 = scmp.lt.s32.totalorder %s19, 0
        %s175 = scalar_select %p174, %s19, 0
        %s176 = smul.addr %s175, 4
        %s177 = scalar_lea.vmem %s1, %s176
      $region16: #{bottleneck_forward.7} parent=11 // pred_fallthru
        _
      // Predicated region
      $region17: #{bottleneck_forward.7} parent=11 // pred_check
        %p178 = pneg %p100
      $region18: #{bottleneck_forward.7} parent=11 // pred_check_branch
        %180 = sbr.rel (%p178) target = $region20
      $region19: #{bottleneck_forward.7} parent=11 // pred_region
        %p181 = scmp.lt.s32.totalorder %s19, 0
        %s182 = scalar_select %p181, %s19, 0
        %s183 = scalar_lea.vmem %s2, %s182
      $region20: #{bottleneck_forward.7} parent=11 // pred_fallthru
        _
    $region12: #{bottleneck_forward.7} parent=5 // pred_fallthru
      _
    %p184 = scmp.lt.s32.totalorder %s10, 8
    // Predicated region
    $region21: #{bottleneck_forward.7} parent=5 // pred_check
      %p185 = pneg %p184
    $region22: #{bottleneck_forward.7} parent=5 // pred_check_branch
      %187 = sbr.rel (%p185) target = $region24
    $region23: #{bottleneck_forward.7} parent=5 // pred_region
      // Predicated region
      $region25: #{bottleneck_forward.7} parent=23 // pred_check
        %p188 = pneg %p42
      $region26: #{bottleneck_forward.7} parent=23 // pred_check_branch
        %190 = sbr.rel (%p188) target = $region28
      $region27: #{bottleneck_forward.7} parent=23 // pred_region
        %s191 = smul.u32 2, %s18
        %p192 = scmp.lt.s32.totalorder %s191, 15
        %s193 = scalar_select %p192, %s191, 15
        %s194 = smul.addr %s193, 4
        %s195 = scalar_lea.vmem %s0, %s194
        %s196 = smul.u32 2, %s18
      $region28: #{bottleneck_forward.7} parent=23 // pred_fallthru
        _
      // Predicated region
      $region29: #{bottleneck_forward.7} parent=23 // pred_check
        %p197 = pneg %p122
      $region30: #{bottleneck_forward.7} parent=23 // pred_check_branch
        %199 = sbr.rel (%p197) target = $region32
      $region31: #{bottleneck_forward.7} parent=23 // pred_region
        %s200 = smul.u32 2, %s18
        %p201 = scmp.lt.s32.totalorder %s200, 15
        %s202 = scalar_select %p201, %s200, 15
        %p203 = scmp.lt.s32.totalorder %s17, 0
        %s204 = scalar_select %p203, %s17, 0
        %s205 = sadd.s32 %s204, %s202
        %s206 = smul.addr %s205, 4
        %s207 = scalar_lea.vmem %s3, %s206
        %s208 = smul.u32 2, %s18
      $region32: #{bottleneck_forward.7} parent=23 // pred_fallthru
        _
    $region24: #{bottleneck_forward.7} parent=5 // pred_fallthru
      _
    %p209 = scmp.le.s32.totalorder 1, %s10
    %p210 = scmp.lt.s32.totalorder %s10, 9
    %p211 = pnand %p209, %p210
    %p212 = pneg %p211
    // Predicated region
    $region33: #{bottleneck_forward.7} parent=5 // pred_check
      _
    $region34: #{bottleneck_forward.7} parent=5 // pred_check_branch
      %214 = sbr.rel (%p211) target = $region36
    $region35: #{bottleneck_forward.7} parent=5 // pred_region
      %s215 = ssub.s32 %s10, 1
      %s216 = smul.u32 2, %s20
      %p217 = scmp.lt.s32.totalorder %s216, 15
      %s218 = scalar_select %p217, %s216, 15
      %s219 = smul.addr %s218, 4
      %s220 = scalar_lea.vmem %s0, %s219
      %p221 = pneg %p48
      %p222 = pneg %p45
      %p223 = scmp.lt.s32.totalorder %s19, 0
      %s224 = scalar_select %p223, %s19, 0
      %s225 = smul.addr %s224, 4
      %s226 = scalar_lea.vmem %s1, %s225
      %p227 = pneg %p74
      %p228 = pneg %p71
      %p229 = scmp.lt.s32.totalorder %s19, 0
      %s230 = scalar_select %p229, %s19, 0
      %s231 = scalar_lea.vmem %s2, %s230
      %p232 = pneg %p100
      %p233 = pneg %p97
      %s234 = smul.u32 2, %s20
      %p235 = scmp.lt.s32.totalorder %s234, 15
      %s236 = scalar_select %p235, %s234, 15
      %p237 = scmp.lt.s32.totalorder %s19, 0
      %s238 = scalar_select %p237, %s19, 0
      %s239 = sadd.s32 %s238, %s236
      %s240 = smul.addr %s239, 4
      %s241 = scalar_lea.vmem %s3, %s240
      %p242 = pneg %p128
      %p243 = pneg %p125
      %p244 = pneg %p156
      %p245 = pneg %p153
      %s246 = smul.u32 2, %s20
      %p247 = scmp.lt.s32.totalorder %s246, 15
      %s248 = scalar_select %p247, %s246, 15
      %p249 = scmp.lt.s32.totalorder %s19, 0
      %s250 = scalar_select %p249, %s19, 0
      %s251 = sadd.s32 %s250, %s248
      %s252 = smul.addr %s251, 4
      %s253 = scalar_lea.vmem %s4, %s252
      %s254 = smul.u32 2, %s20
      %p255 = scmp.lt.s32.totalorder %s254, 15
      %s256 = scalar_select %p255, %s254, 15
      %s257 = smul.addr %s256, 4
      %s258 = scalar_lea.vmem %s0, %s257
      %s259 = smul.u32 2, %s20
      %p260 = scmp.lt.s32.totalorder %s19, 0
      %s261 = scalar_select %p260, %s19, 0
      %s262 = smul.addr %s261, 4
      %s263 = scalar_lea.vmem %s1, %s262
      %p264 = scmp.lt.s32.totalorder %s19, 0
      %s265 = scalar_select %p264, %s19, 0
      %s266 = scalar_lea.vmem %s2, %s265
      %s267 = smul.u32 2, %s20
      %p268 = scmp.lt.s32.totalorder %s267, 15
      %s269 = scalar_select %p268, %s267, 15
      %p270 = scmp.lt.s32.totalorder %s19, 0
      %s271 = scalar_select %p270, %s19, 0
      %s272 = sadd.s32 %s271, %s269
      %s273 = smul.addr %s272, 4
      %s274 = scalar_lea.vmem %s3, %s273
      %s275 = smul.u32 2, %s20
      %s276 = smul.u32 2, %s20
      %p277 = scmp.lt.s32.totalorder %s276, 15
      %s278 = scalar_select %p277, %s276, 15
      %p279 = scmp.lt.s32.totalorder %s19, 0
      %s280 = scalar_select %p279, %s19, 0
      %s281 = sadd.s32 %s280, %s278
      %s282 = smul.addr %s281, 4
      %s283 = scalar_lea.vmem %s4, %s282
      %s284 = smul.u32 2, %s20
      %v286 = vld [vmem:[%s258] sm:$0xf]
      %v287 = vld [vmem:[%s258 + $0x4] sm:$0xf]
      %v288 = vld [vmem:[%s263] sm:$0xf]
      %v289 = vld [vmem:[%s266] sm:$0x1]
      %v291 = vperm.slane %v289, 0
      %v295 = vunpack.c.l.b16 %v286
      %v296 = vunpack.c.l.b16 %v287
      %v297 = vpack.c.b16 %v296, %v295
      %vm298 = vcmask 64512
      %v300 = vsel %vm298, %v297, 0
      %vm302 = vcmask 1043456
      %v304 = vsel %vm302, %v288, 0
      %306 = vmatpush.bf16.msra.mxu0 0
      %307 = vmatpush.bf16.msra.mxu0 0
      %308 = vmatpush.bf16.msra.mxu0 0
      %309 = vmatpush.bf16.msra.mxu0 0
      %310 = vmatpush.bf16.msra.mxu0 0
      %311 = vmatpush.bf16.msra.mxu0 0
      %312 = vmatpush.bf16.msra.mxu0 0
      %313 = vmatpush.bf16.msra.mxu0 %v304
      %314 = vmatmul.bf16.gmra.mxu0 %v300
      %v315 = vpop.f32.mrf.mxu0
      %v316 = vadd.f32 %v291, %v315
      %v317 = vpop.f32.mrf.mxu0
      %v318 = vadd.f32 %v291, %v317
      %319 = vdwg.mxu0
      %v320 = vld [vmem:[%s274] sm:$0xf]
      %v321 = vld [vmem:[%s274 + $0x4] sm:$0xf]
      %v322 = vunpack.c.l.bf16 %v320
      %v323 = vunpack.c.l.bf16 %v321
      %v324 = vadd.f32 %v316, %v322
      %v325 = vadd.f32 %v318, %v323
      %v326 = vmax.f32 %v324, 0.0
      %v327 = vmax.f32 %v325, 0.0
      %v328 = vpack.c.bf16 %v326, %v326
      %v329 = vpack.c.bf16 %v327, %v327
      %vm330 = vcmask 257024
      %331 = vst.msk [vmem:[%s283] sm:$0xf] %vm330, %v328
      %332 = vst.msk [vmem:[%s283 + $0x4] sm:$0xf] %vm330, %v329
      %s333 = smul.u32 2, %s20
      %p334 = scmp.lt.s32.totalorder %s333, 15
      %s335 = scalar_select %p334, %s333, 15
      %p336 = scmp.lt.s32.totalorder %s19, 0
      %s337 = scalar_select %p336, %s19, 0
      %s338 = sadd.s32 %s337, %s335
      %s339 = smul.addr %s338, 4
      %s340 = scalar_lea.vmem %s4, %s339
      // Predicated region
      $region37: #{bottleneck_forward.7} parent=35 // pred_check
        %p341 = pneg %p153
      $region38: #{bottleneck_forward.7} parent=35 // pred_check_branch
        %343 = sbr.rel (%p341) target = $region40
      $region39: #{bottleneck_forward.7} parent=35 // pred_region
        %s344 = smul.u32 2, %s20
      $region40: #{bottleneck_forward.7} parent=35 // pred_fallthru
        _
    $region36: #{bottleneck_forward.7} parent=5 // pred_fallthru
      _
    %p345 = scmp.le.s32.totalorder 2, %s10
    // Predicated region
    $region41: #{bottleneck_forward.7} parent=5 // pred_check
      %p346 = pneg %p345
    $region42: #{bottleneck_forward.7} parent=5 // pred_check_branch
      %348 = sbr.rel (%p346) target = $region44
    $region43: #{bottleneck_forward.7} parent=5 // pred_region
      %s349 = ssub.s32 %s10, 2
      // Predicated region
      $region45: #{bottleneck_forward.7} parent=43 // pred_check
        %p350 = pneg %p159
      $region46: #{bottleneck_forward.7} parent=43 // pred_check_branch
        %352 = sbr.rel (%p350) target = $region48
      $region47: #{bottleneck_forward.7} parent=43 // pred_region
        %s353 = smul.u32 2, %s22
        %p354 = scmp.lt.s32.totalorder %s353, 15
        %s355 = scalar_select %p354, %s353, 15
        %p356 = scmp.lt.s32.totalorder %s21, 0
        %s357 = scalar_select %p356, %s21, 0
        %s358 = sadd.s32 %s357, %s355
        %s359 = smul.addr %s358, 4
        %s360 = scalar_lea.vmem %s4, %s359
      $region48: #{bottleneck_forward.7} parent=43 // pred_fallthru
        _
    $region44: #{bottleneck_forward.7} parent=5 // pred_fallthru
      _
  $region6: #{bottleneck_forward.7} parent=0 // loop_footer
    %s14 = sadd.s32 1, %s10
  $region7: #{bottleneck_forward.7} parent=0 // loop_footer_branch
    %9 = sbr.rel target = $region3
  $region8: #{bottleneck_forward.7} parent=0 // loop_exit
    _

</llo_original>
